<compile_context>
chip_gen: v5e
topology: v5e:2x2
jax: 0.10.0
libtpu: 0.0.40
codegen_flags: <defaults>
</compile_context>

<pallas_src>
import jax
import jax.numpy as jnp
from jax.experimental import pallas as pl
from jax.experimental.pallas import tpu as pltpu

OUT_PAD = 128  # lane-dense padded width of the final (action) dimension


def qnetwork_kernel(x_ref,
                    w1_ref, b1_ref,
                    w2_ref, b2_ref,
                    w3_ref, b3_ref,
                    w4_ref, b4_ref,
                    o_ref):
    """Fused 4-layer MLP: relu(fc1) -> relu(fc2) -> relu(fc3) -> fc4.

    x_ref: [TB, state_size] bf16 tile of the (padded) batch.
    w*_ref: bf16 [in, out] weights (w4 padded to OUT_PAD cols).
    b*_ref: f32 [1, out] biases (b4 padded to OUT_PAD cols).
    o_ref: [TB, OUT_PAD] f32 lane-dense output tile.
    """
    x = x_ref[...]

    h = jnp.dot(x, w1_ref[...], preferred_element_type=jnp.float32) + b1_ref[...]
    h = jnp.maximum(h, 0.0).astype(jnp.bfloat16)
    # dropout(0.1) -> identity in eval mode

    h = jnp.dot(h, w2_ref[...], preferred_element_type=jnp.float32) + b2_ref[...]
    h = jnp.maximum(h, 0.0).astype(jnp.bfloat16)
    # dropout(0.1) -> identity in eval mode

    h = jnp.dot(h, w3_ref[...], preferred_element_type=jnp.float32) + b3_ref[...]
    h = jnp.maximum(h, 0.0).astype(jnp.bfloat16)

    q = jnp.dot(h, w4_ref[...], preferred_element_type=jnp.float32) + b4_ref[...]
    o_ref[...] = q.astype(o_ref.dtype)


def init_params(key, state_size=16, action_size=4, hidden_size=256):
    """f32 params matching nn.Linear default init: U(-1/sqrt(fan_in), +).

    Weights are stored as [in_features, out_features] (transposed from
    PyTorch's [out, in]); biases as [1, out_features].
    """
    dims = [(state_size, hidden_size),
            (hidden_size, hidden_size),
            (hidden_size, hidden_size // 2),
            (hidden_size // 2, action_size)]
    params = {}
    for i, (fan_in, fan_out) in enumerate(dims, start=1):
        key, kw, kb = jax.random.split(key, 3)
        bound = 1.0 / (fan_in ** 0.5)
        params[f"w{i}"] = jax.random.uniform(
            kw, (fan_in, fan_out), jnp.float32, minval=-bound, maxval=bound)
        params[f"b{i}"] = jax.random.uniform(
            kb, (1, fan_out), jnp.float32, minval=-bound, maxval=bound)
    return params


def pack_params(params_f32):
    """Convert f32 params to the kernel layout: bf16 weights, f32 biases,
    fc4 zero-padded to OUT_PAD output columns for a lane-dense final store."""
    action_size = params_f32["w4"].shape[1]
    packed = {}
    for i in (1, 2, 3):
        packed[f"w{i}"] = params_f32[f"w{i}"].astype(jnp.bfloat16)
        packed[f"b{i}"] = params_f32[f"b{i}"].astype(jnp.float32)
    pad = OUT_PAD - action_size
    packed["w4"] = jnp.pad(params_f32["w4"], ((0, 0), (0, pad))).astype(jnp.bfloat16)
    packed["b4"] = jnp.pad(params_f32["b4"], ((0, 0), (0, pad))).astype(jnp.float32)
    return packed, action_size


def qnetwork_forward(x, packed, action_size, *, batch_tile=256):
    """Run the fused QNetwork forward pass.

    x: [B, state_size] float32 (any B; padded internally to a multiple of
       batch_tile so the MXU sees full row tiles).
    packed: output of pack_params().
    Returns [B, action_size] float32 Q-values.
    """
    B, S = x.shape
    n_tiles = (B + batch_tile - 1) // batch_tile
    B_pad = n_tiles * batch_tile

    x_pad = x if B_pad == B else jnp.pad(x, ((0, B_pad - B), (0, 0)))
    x_pad = x_pad.astype(jnp.bfloat16)

    args = (x_pad,
            packed["w1"], packed["b1"],
            packed["w2"], packed["b2"],
            packed["w3"], packed["b3"],
            packed["w4"], packed["b4"])

    def resident_spec(shape):
        # Full-array block with a constant index_map: stays VMEM-resident
        # across all grid steps (no per-step re-DMA). `shape` is bound as a
        # function argument, so there is no late-binding closure bug.
        return pl.BlockSpec(shape, lambda i: (0, 0))

    in_specs = [pl.BlockSpec((batch_tile, S), lambda i: (i, 0))]  # x tile
    in_specs += [resident_spec(a.shape) for a in args[1:]]        # weights/biases

    out = pl.pallas_call(
        qnetwork_kernel,
        out_shape=jax.ShapeDtypeStruct((B_pad, OUT_PAD), jnp.float32),
        grid=(n_tiles,),
        in_specs=in_specs,
        out_specs=pl.BlockSpec((batch_tile, OUT_PAD), lambda i: (i, 0)),
        compiler_params=pltpu.CompilerParams(
            dimension_semantics=("parallel",)),  # shards batch tiles on v7x's 2 TCs
    )(*args)

    return out[:B, :action_size]


def reference_forward(x, params_f32):
    """Pure-JAX reference with the same bf16-input / f32-accumulate numerics."""
    def bdot(a, w):
        return jnp.dot(a.astype(jnp.bfloat16), w.astype(jnp.bfloat16),
                       preferred_element_type=jnp.float32)
    h = jnp.maximum(bdot(x, params_f32["w1"]) + params_f32["b1"], 0.0)
    h = jnp.maximum(bdot(h, params_f32["w2"]) + params_f32["b2"], 0.0)
    h = jnp.maximum(bdot(h, params_f32["w3"]) + params_f32["b3"], 0.0)
    return bdot(h, params_f32["w4"]) + params_f32["b4"]


if __name__ == "__main__":
    key = jax.random.PRNGKey(0)
    key, kx = jax.random.split(key)

    B, STATE, ACTIONS, HIDDEN = 8, 16, 4, 256

    # One-hot states, as FrozenLake DQN feeds the network.
    idx = jax.random.randint(kx, (B,), 0, STATE)
    x = jax.nn.one_hot(idx, STATE, dtype=jnp.float32)

    params = init_params(key, STATE, ACTIONS, HIDDEN)
    packed, action_size = pack_params(params)

    q = qnetwork_forward(x, packed, action_size)
    q = jax.block_until_ready(q)

    q_ref = reference_forward(x, params)
    assert q.shape == (B, ACTIONS)
    assert jnp.allclose(q, q_ref, atol=2e-3, rtol=2e-3), "mismatch vs JAX reference"

    print("KERNEL_OK")
</pallas_src>

<mosaic_0001>
module attributes {stable_mosaic.version = 11 : i64} {
  func.func @qnetwork_kernel(%arg0: i32, %arg1: memref<256x16xbf16, #tpu.memory_space<vmem>>, %arg2: memref<16x256xbf16, #tpu.memory_space<vmem>>, %arg3: memref<1x256xf32, #tpu.memory_space<vmem>>, %arg4: memref<256x256xbf16, #tpu.memory_space<vmem>>, %arg5: memref<1x256xf32, #tpu.memory_space<vmem>>, %arg6: memref<256x128xbf16, #tpu.memory_space<vmem>>, %arg7: memref<1x128xf32, #tpu.memory_space<vmem>>, %arg8: memref<128x128xbf16, #tpu.memory_space<vmem>>, %arg9: memref<1x128xf32, #tpu.memory_space<vmem>>, %arg10: memref<256x128xf32, #tpu.memory_space<vmem>>) attributes {dimension_semantics = [#tpu.dimension_semantics<parallel>], iteration_bounds = array<i64: 1>, scalar_prefetch = 0 : i64, scratch_operands = 0 : i64, tpu.core_type = #tpu.core_type<tc>, window_params = [{transform_indices = @transform_0, window_bounds = array<i64: 256, 16>}, {pipeline_mode = #tpu.pipeline_mode<synchronous>, transform_indices = @transform_1, window_bounds = array<i64: 16, 256>}, {pipeline_mode = #tpu.pipeline_mode<synchronous>, transform_indices = @transform_2, window_bounds = array<i64: 1, 256>}, {pipeline_mode = #tpu.pipeline_mode<synchronous>, transform_indices = @transform_3, window_bounds = array<i64: 256, 256>}, {pipeline_mode = #tpu.pipeline_mode<synchronous>, transform_indices = @transform_4, window_bounds = array<i64: 1, 256>}, {pipeline_mode = #tpu.pipeline_mode<synchronous>, transform_indices = @transform_5, window_bounds = array<i64: 256, 128>}, {pipeline_mode = #tpu.pipeline_mode<synchronous>, transform_indices = @transform_6, window_bounds = array<i64: 1, 128>}, {pipeline_mode = #tpu.pipeline_mode<synchronous>, transform_indices = @transform_7, window_bounds = array<i64: 128, 128>}, {pipeline_mode = #tpu.pipeline_mode<synchronous>, transform_indices = @transform_8, window_bounds = array<i64: 1, 128>}, {transform_indices = @transform_9, window_bounds = array<i64: 256, 128>}]} {
    %c0 = arith.constant 0 : index
    %c0_0 = arith.constant 0 : index
    %0 = vector.load %arg1[%c0, %c0_0] : memref<256x16xbf16, #tpu.memory_space<vmem>>, vector<256x16xbf16>
    %c0_1 = arith.constant 0 : index
    %c0_2 = arith.constant 0 : index
    %1 = vector.load %arg2[%c0_1, %c0_2] : memref<16x256xbf16, #tpu.memory_space<vmem>>, vector<16x256xbf16>
    %cst = arith.constant dense<0.000000e+00> : vector<256x256xf32>
    %2 = tpu.matmul %0, %1, %cst {dimension_numbers = #tpu.dot_dimension_numbers<[1], [0], [0], [1], [0, 0, 1, 1], [], []>} : vector<256x16xbf16>, vector<16x256xbf16>, vector<256x256xf32> -> vector<256x256xf32>
    %c0_3 = arith.constant 0 : index
    %c0_4 = arith.constant 0 : index
    %3 = vector.load %arg3[%c0_3, %c0_4] : memref<1x256xf32, #tpu.memory_space<vmem>>, vector<1x256xf32>
    %4 = vector.broadcast %3 : vector<1x256xf32> to vector<256x256xf32>
    %5 = arith.addf %2, %4 : vector<256x256xf32>
    %cst_5 = arith.constant 0.000000e+00 : f32
    %6 = vector.broadcast %cst_5 : f32 to vector<256x256xf32>
    %7 = arith.maximumf %5, %6 : vector<256x256xf32>
    %8 = arith.truncf %7 : vector<256x256xf32> to vector<256x256xbf16>
    %c0_6 = arith.constant 0 : index
    %c0_7 = arith.constant 0 : index
    %9 = vector.load %arg4[%c0_6, %c0_7] : memref<256x256xbf16, #tpu.memory_space<vmem>>, vector<256x256xbf16>
    %cst_8 = arith.constant dense<0.000000e+00> : vector<256x256xf32>
    %10 = tpu.matmul %8, %9, %cst_8 {dimension_numbers = #tpu.dot_dimension_numbers<[1], [0], [0], [1], [0, 0, 1, 1], [], []>} : vector<256x256xbf16>, vector<256x256xbf16>, vector<256x256xf32> -> vector<256x256xf32>
    %c0_9 = arith.constant 0 : index
    %c0_10 = arith.constant 0 : index
    %11 = vector.load %arg5[%c0_9, %c0_10] : memref<1x256xf32, #tpu.memory_space<vmem>>, vector<1x256xf32>
    %12 = vector.broadcast %11 : vector<1x256xf32> to vector<256x256xf32>
    %13 = arith.addf %10, %12 : vector<256x256xf32>
    %cst_11 = arith.constant 0.000000e+00 : f32
    %14 = vector.broadcast %cst_11 : f32 to vector<256x256xf32>
    %15 = arith.maximumf %13, %14 : vector<256x256xf32>
    %16 = arith.truncf %15 : vector<256x256xf32> to vector<256x256xbf16>
    %c0_12 = arith.constant 0 : index
    %c0_13 = arith.constant 0 : index
    %17 = vector.load %arg6[%c0_12, %c0_13] : memref<256x128xbf16, #tpu.memory_space<vmem>>, vector<256x128xbf16>
    %cst_14 = arith.constant dense<0.000000e+00> : vector<256x128xf32>
    %18 = tpu.matmul %16, %17, %cst_14 {dimension_numbers = #tpu.dot_dimension_numbers<[1], [0], [0], [1], [0, 0, 1, 1], [], []>} : vector<256x256xbf16>, vector<256x128xbf16>, vector<256x128xf32> -> vector<256x128xf32>
    %c0_15 = arith.constant 0 : index
    %c0_16 = arith.constant 0 : index
    %19 = vector.load %arg7[%c0_15, %c0_16] : memref<1x128xf32, #tpu.memory_space<vmem>>, vector<1x128xf32>
    %20 = vector.broadcast %19 : vector<1x128xf32> to vector<256x128xf32>
    %21 = arith.addf %18, %20 : vector<256x128xf32>
    %cst_17 = arith.constant 0.000000e+00 : f32
    %22 = vector.broadcast %cst_17 : f32 to vector<256x128xf32>
    %23 = arith.maximumf %21, %22 : vector<256x128xf32>
    %24 = arith.truncf %23 : vector<256x128xf32> to vector<256x128xbf16>
    %c0_18 = arith.constant 0 : index
    %c0_19 = arith.constant 0 : index
    %25 = vector.load %arg8[%c0_18, %c0_19] : memref<128x128xbf16, #tpu.memory_space<vmem>>, vector<128x128xbf16>
    %cst_20 = arith.constant dense<0.000000e+00> : vector<256x128xf32>
    %26 = tpu.matmul %24, %25, %cst_20 {dimension_numbers = #tpu.dot_dimension_numbers<[1], [0], [0], [1], [0, 0, 1, 1], [], []>} : vector<256x128xbf16>, vector<128x128xbf16>, vector<256x128xf32> -> vector<256x128xf32>
    %c0_21 = arith.constant 0 : index
    %c0_22 = arith.constant 0 : index
    %27 = vector.load %arg9[%c0_21, %c0_22] : memref<1x128xf32, #tpu.memory_space<vmem>>, vector<1x128xf32>
    %28 = vector.broadcast %27 : vector<1x128xf32> to vector<256x128xf32>
    %29 = arith.addf %26, %28 : vector<256x128xf32>
    %c0_23 = arith.constant 0 : index
    %c0_24 = arith.constant 0 : index
    %30 = vector.load %arg10[%c0_23, %c0_24] : memref<256x128xf32, #tpu.memory_space<vmem>>, vector<256x128xf32>
    tpu.vector_store %arg10[%c0_23, %c0_24], %29 {strides = array<i32>} : memref<256x128xf32, #tpu.memory_space<vmem>>, vector<256x128xf32>,
    return
  }
  func.func @transform_0(%arg0: i32) -> (i32, i32) {
    %c0_i32 = arith.constant 0 : i32
    %c0_i32_0 = arith.constant 0 : i32
    return %arg0, %c0_i32 : i32, i32
  }
  func.func @transform_1(%arg0: i32) -> (i32, i32) {
    %c0_i32 = arith.constant 0 : i32
    %c0_i32_0 = arith.constant 0 : i32
    %c0_i32_1 = arith.constant 0 : i32
    return %c0_i32, %c0_i32_0 : i32, i32
  }
  func.func @transform_2(%arg0: i32) -> (i32, i32) {
    %c0_i32 = arith.constant 0 : i32
    %c0_i32_0 = arith.constant 0 : i32
    %c0_i32_1 = arith.constant 0 : i32
    return %c0_i32, %c0_i32_0 : i32, i32
  }
  func.func @transform_3(%arg0: i32) -> (i32, i32) {
    %c0_i32 = arith.constant 0 : i32
    %c0_i32_0 = arith.constant 0 : i32
    %c0_i32_1 = arith.constant 0 : i32
    return %c0_i32, %c0_i32_0 : i32, i32
  }
  func.func @transform_4(%arg0: i32) -> (i32, i32) {
    %c0_i32 = arith.constant 0 : i32
    %c0_i32_0 = arith.constant 0 : i32
    %c0_i32_1 = arith.constant 0 : i32
    return %c0_i32, %c0_i32_0 : i32, i32
  }
  func.func @transform_5(%arg0: i32) -> (i32, i32) {
    %c0_i32 = arith.constant 0 : i32
    %c0_i32_0 = arith.constant 0 : i32
    %c0_i32_1 = arith.constant 0 : i32
    return %c0_i32, %c0_i32_0 : i32, i32
  }
  func.func @transform_6(%arg0: i32) -> (i32, i32) {
    %c0_i32 = arith.constant 0 : i32
    %c0_i32_0 = arith.constant 0 : i32
    %c0_i32_1 = arith.constant 0 : i32
    return %c0_i32, %c0_i32_0 : i32, i32
  }
  func.func @transform_7(%arg0: i32) -> (i32, i32) {
    %c0_i32 = arith.constant 0 : i32
    %c0_i32_0 = arith.constant 0 : i32
    %c0_i32_1 = arith.constant 0 : i32
    return %c0_i32, %c0_i32_0 : i32, i32
  }
  func.func @transform_8(%arg0: i32) -> (i32, i32) {
    %c0_i32 = arith.constant 0 : i32
    %c0_i32_0 = arith.constant 0 : i32
    %c0_i32_1 = arith.constant 0 : i32
    return %c0_i32, %c0_i32_0 : i32, i32
  }
  func.func @transform_9(%arg0: i32) -> (i32, i32) {
    %c0_i32 = arith.constant 0 : i32
    %c0_i32_0 = arith.constant 0 : i32
    return %arg0, %c0_i32 : i32, i32
  }
}

</mosaic_0001>

<llo_original>
// kernel: tpu_custom_call.1
$region0: #{tpu_custom_call.1}
  #allocation0 [shape = 'u32[]', space=smem, size = 0x4, offset = 0x4, fixed_abs, tag = 'smem constant byte address 0x4 - core index']
  #allocation1 [shape = 'u32[72,128]{1,0:T(1,128)}', space=vmem, size = 0x9000, scoped, tag = 'internal scratch']
  %s0 = inlined_call_operand.vmem [shape: bf16[256,16], index: 0, kind: input, shape index: {}]
  %s1 = inlined_call_operand.vmem [shape: bf16[16,256], index: 1, kind: input, shape index: {}]
  %s2 = inlined_call_operand.vmem [shape: f32[1,256], index: 2, kind: input, shape index: {}]
  %s3 = inlined_call_operand.hbm [shape: bf16[256,256], index: 3, kind: input, shape index: {}]
  %s4 = inlined_call_operand.vmem [shape: f32[1,256], index: 4, kind: input, shape index: {}]
  %s5 = inlined_call_operand.vmem [shape: bf16[256,128], index: 5, kind: input, shape index: {}]
  %s6 = inlined_call_operand.vmem [shape: f32[1,128], index: 6, kind: input, shape index: {}]
  %s7 = inlined_call_operand.hbm [shape: bf16[128,128], index: 7, kind: input, shape index: {}]
  %s8 = inlined_call_operand.vmem [shape: f32[1,128], index: 8, kind: input, shape index: {}]
  %s9 = inlined_call_operand.hbm [shape: f32[256,128], index: 9, kind: output, shape index: {}]
  %s10 = sld [smem:[#allocation0]]
  $region54: #{tpu_custom_call.1} parent=0
    _
  %s12 = ssub.s32 1, %s10
  %s13 = scalar_select 0, %s12, %s10
  $region1: #{tpu_custom_call.1} parent=0
    #allocation2 [shape = 'u8[131072]{0}', space=vmem, size = 0x20000, scoped, tag = 'input window, operand 3, single buffered']
    #allocation3 [shape = 's32[1]{0}', space=sflag, size = 0x4, scoped, tag = 'scoped memory for tpu_custom_call.1']
    #allocation4 [shape = 's32[1]{0}', space=sflag, size = 0x4, scoped, tag = 'scoped memory for tpu_custom_call.1']
    #allocation5 [shape = 'u8[32768]{0}', space=vmem, size = 0x8000, scoped, tag = 'input window, operand 7, single buffered']
    #allocation6 [shape = 's32[1]{0}', space=sflag, size = 0x4, scoped, tag = 'scoped memory for tpu_custom_call.1']
    #allocation7 [shape = 'u8[131072]{0}', space=vmem, size = 0x20000, scoped, tag = 'output window, operand 0, single buffered']
    %14 = vsyncpa [#allocation3], 0
    %15 = vsyncpa [#allocation6], 0
    %16 = vsyncpa [#allocation4], 0
    // Predicated region
    $region2: #{tpu_custom_call.1} parent=1 // pred_check
      _
    $region3: #{tpu_custom_call.1} parent=1 // pred_check_branch
      %18 = sbr.rel (0) target = $region5
    $region4: #{tpu_custom_call.1} parent=1 // pred_region
      _
    $region5: #{tpu_custom_call.1} parent=1 // pred_fallthru
      _
    // Predicated region
    $region6: #{tpu_custom_call.1} parent=1 // pred_check
      _
    $region7: #{tpu_custom_call.1} parent=1 // pred_check_branch
      %20 = sbr.rel (0) target = $region9
    $region8: #{tpu_custom_call.1} parent=1 // pred_region
      _
    $region9: #{tpu_custom_call.1} parent=1 // pred_fallthru
      _
    // Predicated region
    $region10: #{tpu_custom_call.1} parent=1 // pred_check
      _
    $region11: #{tpu_custom_call.1} parent=1 // pred_check_branch
      %22 = sbr.rel (0) target = $region13
    $region12: #{tpu_custom_call.1} parent=1 // pred_region
      _
    $region13: #{tpu_custom_call.1} parent=1 // pred_fallthru
      _
    // Predicated region
    $region14: #{tpu_custom_call.1} parent=1 // pred_check
      _
    $region15: #{tpu_custom_call.1} parent=1 // pred_check_branch
      %24 = sbr.rel (0) target = $region17
    $region16: #{tpu_custom_call.1} parent=1 // pred_region
      %26 = vsyncadd [#allocation3], 0
      %s27 = sshll.u32 %s3, 4
      %s28 = int_to_ptr.hbm [resolvable:$true] %s27
      %s29 = sshll.u32 [#allocation2], 4
      %s30 = int_to_ptr.vmem [resolvable:$true] %s29
      %35 = dma.hbm_to_vmem [thread:$0]  %s28, 4096, %s30, [#allocation3], 128, 128, 8
    $region17: #{tpu_custom_call.1} parent=1 // pred_fallthru
      _
    // Predicated region
    $region18: #{tpu_custom_call.1} parent=1 // pred_check
      _
    $region19: #{tpu_custom_call.1} parent=1 // pred_check_branch
      %37 = sbr.rel (0) target = $region21
    $region20: #{tpu_custom_call.1} parent=1 // pred_region
      _
    $region21: #{tpu_custom_call.1} parent=1 // pred_fallthru
      _
    // Predicated region
    $region22: #{tpu_custom_call.1} parent=1 // pred_check
      _
    $region23: #{tpu_custom_call.1} parent=1 // pred_check_branch
      %39 = sbr.rel (0) target = $region25
    $region24: #{tpu_custom_call.1} parent=1 // pred_region
      _
    $region25: #{tpu_custom_call.1} parent=1 // pred_fallthru
      _
    // Predicated region
    $region26: #{tpu_custom_call.1} parent=1 // pred_check
      _
    $region27: #{tpu_custom_call.1} parent=1 // pred_check_branch
      %41 = sbr.rel (0) target = $region29
    $region28: #{tpu_custom_call.1} parent=1 // pred_region
      _
    $region29: #{tpu_custom_call.1} parent=1 // pred_fallthru
      _
    // Predicated region
    $region30: #{tpu_custom_call.1} parent=1 // pred_check
      _
    $region31: #{tpu_custom_call.1} parent=1 // pred_check_branch
      %43 = sbr.rel (0) target = $region33
    $region32: #{tpu_custom_call.1} parent=1 // pred_region
      %45 = vsyncadd [#allocation6], 0
      %s46 = sshll.u32 %s7, 4
      %s47 = int_to_ptr.hbm [resolvable:$true] %s46
      %s48 = sshll.u32 [#allocation5], 4
      %s49 = int_to_ptr.vmem [resolvable:$true] %s48
      %54 = dma.hbm_to_vmem [thread:$0]  %s47, 1024, %s49, [#allocation6], 64, 64, 4
    $region33: #{tpu_custom_call.1} parent=1 // pred_fallthru
      _
    // Predicated region
    $region34: #{tpu_custom_call.1} parent=1 // pred_check
      _
    $region35: #{tpu_custom_call.1} parent=1 // pred_check_branch
      %56 = sbr.rel (0) target = $region37
    $region36: #{tpu_custom_call.1} parent=1 // pred_region
      _
    $region37: #{tpu_custom_call.1} parent=1 // pred_fallthru
      _
    // Predicated region
    $region38: #{tpu_custom_call.1} parent=1 // pred_check
      _
    $region39: #{tpu_custom_call.1} parent=1 // pred_check_branch
      %58 = sbr.rel (0) target = $region41
    $region40: #{tpu_custom_call.1} parent=1 // pred_region
      %60 = dma.done [#allocation3], 4096
    $region41: #{tpu_custom_call.1} parent=1 // pred_fallthru
      _
    // Predicated region
    $region42: #{tpu_custom_call.1} parent=1 // pred_check
      _
    $region43: #{tpu_custom_call.1} parent=1 // pred_check_branch
      %62 = sbr.rel (0) target = $region45
    $region44: #{tpu_custom_call.1} parent=1 // pred_region
      %64 = dma.done [#allocation6], 1024
    $region45: #{tpu_custom_call.1} parent=1 // pred_fallthru
      _
    %v66 = vld [vmem:[%s0] sm:$0xf]
    %v67 = vld [vmem:[%s0 + $0x4] sm:$0xf]
    %v68 = vld [vmem:[%s0 + $0x8] sm:$0xf]
    %v69 = vld [vmem:[%s0 + $0xc] sm:$0xf]
    %v70 = vld [vmem:[%s0 + $0x10] sm:$0xf]
    %v71 = vld [vmem:[%s0 + $0x14] sm:$0xf]
    %v72 = vld [vmem:[%s0 + $0x18] sm:$0xf]
    %v73 = vld [vmem:[%s0 + $0x1c] sm:$0xf]
    %v74 = vld [vmem:[%s0 + $0x20] sm:$0xf]
    %v75 = vld [vmem:[%s0 + $0x24] sm:$0xf]
    %v76 = vld [vmem:[%s0 + $0x28] sm:$0xf]
    %v77 = vld [vmem:[%s0 + $0x2c] sm:$0xf]
    %v78 = vld [vmem:[%s0 + $0x30] sm:$0xf]
    %v79 = vld [vmem:[%s0 + $0x34] sm:$0xf]
    %v80 = vld [vmem:[%s0 + $0x38] sm:$0xf]
    %v81 = vld [vmem:[%s0 + $0x3c] sm:$0xf]
    %v82 = vld [vmem:[%s0 + $0x40] sm:$0xf]
    %v83 = vld [vmem:[%s0 + $0x44] sm:$0xf]
    %v84 = vld [vmem:[%s0 + $0x48] sm:$0xf]
    %v85 = vld [vmem:[%s0 + $0x4c] sm:$0xf]
    %v86 = vld [vmem:[%s0 + $0x50] sm:$0xf]
    %v87 = vld [vmem:[%s0 + $0x54] sm:$0xf]
    %v88 = vld [vmem:[%s0 + $0x58] sm:$0xf]
    %v89 = vld [vmem:[%s0 + $0x5c] sm:$0xf]
    %v90 = vld [vmem:[%s0 + $0x60] sm:$0xf]
    %v91 = vld [vmem:[%s0 + $0x64] sm:$0xf]
    %v92 = vld [vmem:[%s0 + $0x68] sm:$0xf]
    %v93 = vld [vmem:[%s0 + $0x6c] sm:$0xf]
    %v94 = vld [vmem:[%s0 + $0x70] sm:$0xf]
    %v95 = vld [vmem:[%s0 + $0x74] sm:$0xf]
    %v96 = vld [vmem:[%s0 + $0x78] sm:$0xf]
    %v97 = vld [vmem:[%s0 + $0x7c] sm:$0xf]
    %v98 = vld [vmem:[%s1] sm:$0xff]
    %v99 = vld [vmem:[%s1 + $0x8] sm:$0xff]
    %v100 = vld [vmem:[%s2] sm:$0x3]
    %v102 = vperm.slane %v100, 0
    %v103 = vperm.slane %v100, 1
    %v138 = vunpack.c.l.b16 %v66
    %v139 = vunpack.c.l.b16 %v67
    %v140 = vunpack.c.l.b16 %v68
    %v141 = vunpack.c.l.b16 %v69
    %v142 = vunpack.c.l.b16 %v70
    %v143 = vunpack.c.l.b16 %v71
    %v144 = vunpack.c.l.b16 %v72
    %v145 = vunpack.c.l.b16 %v73
    %v146 = vunpack.c.l.b16 %v74
    %v147 = vunpack.c.l.b16 %v75
    %v148 = vunpack.c.l.b16 %v76
    %v149 = vunpack.c.l.b16 %v77
    %v150 = vunpack.c.l.b16 %v78
    %v151 = vunpack.c.l.b16 %v79
    %v152 = vunpack.c.l.b16 %v80
    %v153 = vunpack.c.l.b16 %v81
    %v154 = vunpack.c.l.b16 %v82
    %v155 = vunpack.c.l.b16 %v83
    %v156 = vunpack.c.l.b16 %v84
    %v157 = vunpack.c.l.b16 %v85
    %v158 = vunpack.c.l.b16 %v86
    %v159 = vunpack.c.l.b16 %v87
    %v160 = vunpack.c.l.b16 %v88
    %v161 = vunpack.c.l.b16 %v89
    %v162 = vunpack.c.l.b16 %v90
    %v163 = vunpack.c.l.b16 %v91
    %v164 = vunpack.c.l.b16 %v92
    %v165 = vunpack.c.l.b16 %v93
    %v166 = vunpack.c.l.b16 %v94
    %v167 = vunpack.c.l.b16 %v95
    %v168 = vunpack.c.l.b16 %v96
    %v169 = vunpack.c.l.b16 %v97
    %v170 = vpack.c.b16 %v139, %v138
    %v171 = vpack.c.b16 %v141, %v140
    %v172 = vpack.c.b16 %v143, %v142
    %v173 = vpack.c.b16 %v145, %v144
    %v174 = vpack.c.b16 %v147, %v146
    %v175 = vpack.c.b16 %v149, %v148
    %v176 = vpack.c.b16 %v151, %v150
    %v177 = vpack.c.b16 %v153, %v152
    %v178 = vpack.c.b16 %v155, %v154
    %v179 = vpack.c.b16 %v157, %v156
    %v180 = vpack.c.b16 %v159, %v158
    %v181 = vpack.c.b16 %v161, %v160
    %v182 = vpack.c.b16 %v163, %v162
    %v183 = vpack.c.b16 %v165, %v164
    %v184 = vpack.c.b16 %v167, %v166
    %v185 = vpack.c.b16 %v169, %v168
    %v188 = vunpack.c.l.b16 %v98
    %v189 = vunpack.c.h.b16 %v98
    %v190 = vunpack.c.l.b16 %v99
    %v191 = vunpack.c.h.b16 %v99
    %v192 = vpack.c.b16 %v190, %v188
    %v193 = vpack.c.b16 %v191, %v189
    %vm196 = vcmask 130048
    %v198 = vsel %vm196, %v170, 0
    %v201 = vsel %vm196, %v171, 0
    %v204 = vsel %vm196, %v172, 0
    %v207 = vsel %vm196, %v173, 0
    %v210 = vsel %vm196, %v174, 0
    %v213 = vsel %vm196, %v175, 0
    %v216 = vsel %vm196, %v176, 0
    %v219 = vsel %vm196, %v177, 0
    %v222 = vsel %vm196, %v178, 0
    %v225 = vsel %vm196, %v179, 0
    %v228 = vsel %vm196, %v180, 0
    %v231 = vsel %vm196, %v181, 0
    %v234 = vsel %vm196, %v182, 0
    %v237 = vsel %vm196, %v183, 0
    %v240 = vsel %vm196, %v184, 0
    %v243 = vsel %vm196, %v185, 0
    %245 = vmatpush.bf16.msra.mxu0 0
    %246 = vmatpush.bf16.msra.mxu0 0
    %247 = vmatpush.bf16.msra.mxu0 0
    %248 = vmatpush.bf16.msra.mxu0 0
    %249 = vmatpush.bf16.msra.mxu0 0
    %250 = vmatpush.bf16.msra.mxu0 0
    %251 = vmatpush.bf16.msra.mxu0 0
    %252 = vmatpush.bf16.msra.mxu0 %v192
    %253 = vmatmul.bf16.gmra.mxu0 %v198
    %v254 = vpop.f32.mrf.mxu0
    %v255 = vadd.f32 %v102, %v254
    %v256 = vpop.f32.mrf.mxu0
    %v257 = vadd.f32 %v102, %v256
    %258 = vmatmul.bf16.gmra.mxu0 %v201
    %v259 = vpop.f32.mrf.mxu0
    %v260 = vadd.f32 %v102, %v259
    %v261 = vpop.f32.mrf.mxu0
    %v262 = vadd.f32 %v102, %v261
    %263 = vmatmul.bf16.gmra.mxu0 %v204
    %v264 = vpop.f32.mrf.mxu0
    %v265 = vadd.f32 %v102, %v264
    %v266 = vpop.f32.mrf.mxu0
    %v267 = vadd.f32 %v102, %v266
    %268 = vmatmul.bf16.gmra.mxu0 %v207
    %v269 = vpop.f32.mrf.mxu0
    %v270 = vadd.f32 %v102, %v269
    %v271 = vpop.f32.mrf.mxu0
    %v272 = vadd.f32 %v102, %v271
    %273 = vmatmul.bf16.gmra.mxu0 %v210
    %v274 = vpop.f32.mrf.mxu0
    %v275 = vadd.f32 %v102, %v274
    %v276 = vpop.f32.mrf.mxu0
    %v277 = vadd.f32 %v102, %v276
    %278 = vmatmul.bf16.gmra.mxu0 %v213
    %v279 = vpop.f32.mrf.mxu0
    %v280 = vadd.f32 %v102, %v279
    %v281 = vpop.f32.mrf.mxu0
    %v282 = vadd.f32 %v102, %v281
    %283 = vmatmul.bf16.gmra.mxu0 %v216
    %v284 = vpop.f32.mrf.mxu0
    %v285 = vadd.f32 %v102, %v284
    %v286 = vpop.f32.mrf.mxu0
    %v287 = vadd.f32 %v102, %v286
    %288 = vmatmul.bf16.gmra.mxu0 %v219
    %v289 = vpop.f32.mrf.mxu0
    %v290 = vadd.f32 %v102, %v289
    %v291 = vpop.f32.mrf.mxu0
    %v292 = vadd.f32 %v102, %v291
    %293 = vmatmul.bf16.gmra.mxu0 %v222
    %v294 = vpop.f32.mrf.mxu0
    %v295 = vadd.f32 %v102, %v294
    %v296 = vpop.f32.mrf.mxu0
    %v297 = vadd.f32 %v102, %v296
    %298 = vmatmul.bf16.gmra.mxu0 %v225
    %v299 = vpop.f32.mrf.mxu0
    %v300 = vadd.f32 %v102, %v299
    %v301 = vpop.f32.mrf.mxu0
    %v302 = vadd.f32 %v102, %v301
    %303 = vmatmul.bf16.gmra.mxu0 %v228
    %v304 = vpop.f32.mrf.mxu0
    %v305 = vadd.f32 %v102, %v304
    %v306 = vpop.f32.mrf.mxu0
    %v307 = vadd.f32 %v102, %v306
    %308 = vmatmul.bf16.gmra.mxu0 %v231
    %v309 = vpop.f32.mrf.mxu0
    %v310 = vadd.f32 %v102, %v309
    %v311 = vpop.f32.mrf.mxu0
    %v312 = vadd.f32 %v102, %v311
    %313 = vmatmul.bf16.gmra.mxu0 %v234
    %v314 = vpop.f32.mrf.mxu0
    %v315 = vadd.f32 %v102, %v314
    %v316 = vpop.f32.mrf.mxu0
    %v317 = vadd.f32 %v102, %v316
    %318 = vmatmul.bf16.gmra.mxu0 %v237
    %v319 = vpop.f32.mrf.mxu0
    %v320 = vadd.f32 %v102, %v319
    %v321 = vpop.f32.mrf.mxu0
    %v322 = vadd.f32 %v102, %v321
    %323 = vmatmul.bf16.gmra.mxu0 %v240
    %v324 = vpop.f32.mrf.mxu0
    %v325 = vadd.f32 %v102, %v324
    %v326 = vpop.f32.mrf.mxu0
    %v327 = vadd.f32 %v102, %v326
    %328 = vmatmul.bf16.gmra.mxu0 %v243
    %v329 = vpop.f32.mrf.mxu0
    %v330 = vadd.f32 %v102, %v329
    %v331 = vpop.f32.mrf.mxu0
    %v332 = vadd.f32 %v102, %v331
    %333 = vdwg.mxu0
    %334 = vmatpush.bf16.msra.mxu0 0
    %335 = vmatpush.bf16.msra.mxu0 0
    %336 = vmatpush.bf16.msra.mxu0 0
    %337 = vmatpush.bf16.msra.mxu0 0
    %338 = vmatpush.bf16.msra.mxu0 0
    %339 = vmatpush.bf16.msra.mxu0 0
    %340 = vmatpush.bf16.msra.mxu0 0
    %341 = vmatpush.bf16.msra.mxu0 %v193
    %342 = vmatmul.bf16.gmra.mxu0 %v198
    %v343 = vpop.f32.mrf.mxu0
    %v344 = vadd.f32 %v103, %v343
    %v345 = vpop.f32.mrf.mxu0
    %v346 = vadd.f32 %v103, %v345
    %347 = vmatmul.bf16.gmra.mxu0 %v201
    %v348 = vpop.f32.mrf.mxu0
    %v349 = vadd.f32 %v103, %v348
    %v350 = vpop.f32.mrf.mxu0
    %v351 = vadd.f32 %v103, %v350
    %352 = vmatmul.bf16.gmra.mxu0 %v204
    %v353 = vpop.f32.mrf.mxu0
    %v354 = vadd.f32 %v103, %v353
    %v355 = vpop.f32.mrf.mxu0
    %v356 = vadd.f32 %v103, %v355
    %357 = vmatmul.bf16.gmra.mxu0 %v207
    %v358 = vpop.f32.mrf.mxu0
    %v359 = vadd.f32 %v103, %v358
    %v360 = vpop.f32.mrf.mxu0
    %v361 = vadd.f32 %v103, %v360
    %362 = vmatmul.bf16.gmra.mxu0 %v210
    %v363 = vpop.f32.mrf.mxu0
    %v364 = vadd.f32 %v103, %v363
    %v365 = vpop.f32.mrf.mxu0
    %v366 = vadd.f32 %v103, %v365
    %367 = vmatmul.bf16.gmra.mxu0 %v213
    %v368 = vpop.f32.mrf.mxu0
    %v369 = vadd.f32 %v103, %v368
    %v370 = vpop.f32.mrf.mxu0
    %v371 = vadd.f32 %v103, %v370
    %372 = vmatmul.bf16.gmra.mxu0 %v216
    %v373 = vpop.f32.mrf.mxu0
    %v374 = vadd.f32 %v103, %v373
    %v375 = vpop.f32.mrf.mxu0
    %v376 = vadd.f32 %v103, %v375
    %377 = vmatmul.bf16.gmra.mxu0 %v219
    %v378 = vpop.f32.mrf.mxu0
    %v379 = vadd.f32 %v103, %v378
    %v380 = vpop.f32.mrf.mxu0
    %v381 = vadd.f32 %v103, %v380
    %382 = vmatmul.bf16.gmra.mxu0 %v222
    %v383 = vpop.f32.mrf.mxu0
    %v384 = vadd.f32 %v103, %v383
    %v385 = vpop.f32.mrf.mxu0
    %v386 = vadd.f32 %v103, %v385
    %387 = vmatmul.bf16.gmra.mxu0 %v225
    %v388 = vpop.f32.mrf.mxu0
    %v389 = vadd.f32 %v103, %v388
    %v390 = vpop.f32.mrf.mxu0
    %v391 = vadd.f32 %v103, %v390
    %392 = vmatmul.bf16.gmra.mxu0 %v228
    %v393 = vpop.f32.mrf.mxu0
    %v394 = vadd.f32 %v103, %v393
    %v395 = vpop.f32.mrf.mxu0
    %v396 = vadd.f32 %v103, %v395
    %397 = vmatmul.bf16.gmra.mxu0 %v231
    %v398 = vpop.f32.mrf.mxu0
    %v399 = vadd.f32 %v103, %v398
    %v400 = vpop.f32.mrf.mxu0
    %v401 = vadd.f32 %v103, %v400
    %402 = vmatmul.bf16.gmra.mxu0 %v234
    %v403 = vpop.f32.mrf.mxu0
    %v404 = vadd.f32 %v103, %v403
    %v405 = vpop.f32.mrf.mxu0
    %v406 = vadd.f32 %v103, %v405
    %407 = vmatmul.bf16.gmra.mxu0 %v237
    %v408 = vpop.f32.mrf.mxu0
    %v409 = vadd.f32 %v103, %v408
    %v410 = vpop.f32.mrf.mxu0
    %v411 = vadd.f32 %v103, %v410
    %412 = vmatmul.bf16.gmra.mxu0 %v240
    %v413 = vpop.f32.mrf.mxu0
    %v414 = vadd.f32 %v103, %v413
    %v415 = vpop.f32.mrf.mxu0
    %v416 = vadd.f32 %v103, %v415
    %417 = vmatmul.bf16.gmra.mxu0 %v243
    %v418 = vpop.f32.mrf.mxu0
    %v419 = vadd.f32 %v103, %v418
    %v420 = vpop.f32.mrf.mxu0
    %v421 = vadd.f32 %v103, %v420
    %422 = vdwg.mxu0
    %v423 = vmax.f32 %v255, 0.0
    %v424 = vmax.f32 %v344, 0.0
    %v425 = vmax.f32 %v257, 0.0
    %v426 = vmax.f32 %v346, 0.0
    %v427 = vmax.f32 %v260, 0.0
    %v428 = vmax.f32 %v349, 0.0
    %v429 = vmax.f32 %v262, 0.0
    %v430 = vmax.f32 %v351, 0.0
    %v431 = vmax.f32 %v265, 0.0
    %v432 = vmax.f32 %v354, 0.0
    %v433 = vmax.f32 %v267, 0.0
    %v434 = vmax.f32 %v356, 0.0
    %v435 = vmax.f32 %v270, 0.0
    %v436 = vmax.f32 %v359, 0.0
    %v437 = vmax.f32 %v272, 0.0
    %v438 = vmax.f32 %v361, 0.0
    %v439 = vmax.f32 %v275, 0.0
    %v440 = vmax.f32 %v364, 0.0
    %v441 = vmax.f32 %v277, 0.0
    %v442 = vmax.f32 %v366, 0.0
    %v443 = vmax.f32 %v280, 0.0
    %v444 = vmax.f32 %v369, 0.0
    %v445 = vmax.f32 %v282, 0.0
    %v446 = vmax.f32 %v371, 0.0
    %v447 = vmax.f32 %v285, 0.0
    %v448 = vmax.f32 %v374, 0.0
    %v449 = vmax.f32 %v287, 0.0
    %v450 = vmax.f32 %v376, 0.0
    %v451 = vmax.f32 %v290, 0.0
    %v452 = vmax.f32 %v379, 0.0
    %v453 = vmax.f32 %v292, 0.0
    %v454 = vmax.f32 %v381, 0.0
    %v455 = vmax.f32 %v295, 0.0
    %v456 = vmax.f32 %v384, 0.0
    %v457 = vmax.f32 %v297, 0.0
    %v458 = vmax.f32 %v386, 0.0
    %v459 = vmax.f32 %v300, 0.0
    %v460 = vmax.f32 %v389, 0.0
    %v461 = vmax.f32 %v302, 0.0
    %v462 = vmax.f32 %v391, 0.0
    %v463 = vmax.f32 %v305, 0.0
    %v464 = vmax.f32 %v394, 0.0
    %v465 = vmax.f32 %v307, 0.0
    %v466 = vmax.f32 %v396, 0.0
    %v467 = vmax.f32 %v310, 0.0
    %v468 = vmax.f32 %v399, 0.0
    %v469 = vmax.f32 %v312, 0.0
    %v470 = vmax.f32 %v401, 0.0
    %v471 = vmax.f32 %v315, 0.0
    %v472 = vmax.f32 %v404, 0.0
    %v473 = vmax.f32 %v317, 0.0
    %v474 = vmax.f32 %v406, 0.0
    %v475 = vmax.f32 %v320, 0.0
    %v476 = vmax.f32 %v409, 0.0
    %v477 = vmax.f32 %v322, 0.0
    %v478 = vmax.f32 %v411, 0.0
    %v479 = vmax.f32 %v325, 0.0
    %v480 = vmax.f32 %v414, 0.0
    %v481 = vmax.f32 %v327, 0.0
    %v482 = vmax.f32 %v416, 0.0
    %v483 = vmax.f32 %v330, 0.0
    %v484 = vmax.f32 %v419, 0.0
    %v485 = vmax.f32 %v332, 0.0
    %v486 = vmax.f32 %v421, 0.0
    %v487 = vpack.c.bf16 %v425, %v423
    %v488 = vpack.c.bf16 %v426, %v424
    %v489 = vpack.c.bf16 %v429, %v427
    %v490 = vpack.c.bf16 %v430, %v428
    %v491 = vpack.c.bf16 %v433, %v431
    %v492 = vpack.c.bf16 %v434, %v432
    %v493 = vpack.c.bf16 %v437, %v435
    %v494 = vpack.c.bf16 %v438, %v436
    %v495 = vpack.c.bf16 %v441, %v439
    %v496 = vpack.c.bf16 %v442, %v440
    %v497 = vpack.c.bf16 %v445, %v443
    %v498 = vpack.c.bf16 %v446, %v444
    %v499 = vpack.c.bf16 %v449, %v447
    %v500 = vpack.c.bf16 %v450, %v448
    %v501 = vpack.c.bf16 %v453, %v451
    %v502 = vpack.c.bf16 %v454, %v452
    %v503 = vpack.c.bf16 %v457, %v455
    %v504 = vpack.c.bf16 %v458, %v456
    %v505 = vpack.c.bf16 %v461, %v459
    %v506 = vpack.c.bf16 %v462, %v460
    %v507 = vpack.c.bf16 %v465, %v463
    %v508 = vpack.c.bf16 %v466, %v464
    %v509 = vpack.c.bf16 %v469, %v467
    %v510 = vpack.c.bf16 %v470, %v468
    %v511 = vpack.c.bf16 %v473, %v471
    %v512 = vpack.c.bf16 %v474, %v472
    %v513 = vpack.c.bf16 %v477, %v475
    %v514 = vpack.c.bf16 %v478, %v476
    %v515 = vpack.c.bf16 %v481, %v479
    %v516 = vpack.c.bf16 %v482, %v480
    %v517 = vpack.c.bf16 %v485, %v483
    %v518 = vpack.c.bf16 %v486, %v484
    %v519 = vld [vmem:[#allocation2] sm:$0xff]
    %v520 = vld [vmem:[#allocation2 + $0x8] sm:$0xff]
    %v521 = vld [vmem:[#allocation2 + $0x10] sm:$0xff]
    %v522 = vld [vmem:[#allocation2 + $0x18] sm:$0xff]
    %v523 = vld [vmem:[#allocation2 + $0x20] sm:$0xff]
    %v524 = vld [vmem:[#allocation2 + $0x28] sm:$0xff]
    %v525 = vld [vmem:[#allocation2 + $0x30] sm:$0xff]
    %v526 = vld [vmem:[#allocation2 + $0x38] sm:$0xff]
    %v527 = vld [vmem:[#allocation2 + $0x40] sm:$0xff]
    %v528 = vld [vmem:[#allocation2 + $0x48] sm:$0xff]
    %v529 = vld [vmem:[#allocation2 + $0x50] sm:$0xff]
    %v530 = vld [vmem:[#allocation2 + $0x58] sm:$0xff]
    %v531 = vld [vmem:[#allocation2 + $0x60] sm:$0xff]
    %v532 = vld [vmem:[#allocation2 + $0x68] sm:$0xff]
    %v533 = vld [vmem:[#allocation2 + $0x70] sm:$0xff]
    %v534 = vld [vmem:[#allocation2 + $0x78] sm:$0xff]
    %v535 = vld [vmem:[#allocation2 + $0x80] sm:$0xff]
    %v536 = vld [vmem:[#allocation2 + $0x88] sm:$0xff]
    %v537 = vld [vmem:[#allocation2 + $0x90] sm:$0xff]
    %v538 = vld [vmem:[#allocation2 + $0x98] sm:$0xff]
    %v539 = vld [vmem:[#allocation2 + $0xa0] sm:$0xff]
    %v540 = vld [vmem:[#allocation2 + $0xa8] sm:$0xff]
    %v541 = vld [vmem:[#allocation2 + $0xb0] sm:$0xff]
    %v542 = vld [vmem:[#allocation2 + $0xb8] sm:$0xff]
    %v543 = vld [vmem:[#allocation2 + $0xc0] sm:$0xff]
    %v544 = vld [vmem:[#allocation2 + $0xc8] sm:$0xff]
    %v545 = vld [vmem:[#allocation2 + $0xd0] sm:$0xff]
    %v546 = vld [vmem:[#allocation2 + $0xd8] sm:$0xff]
    %v547 = vld [vmem:[#allocation2 + $0xe0] sm:$0xff]
    %v548 = vld [vmem:[#allocation2 + $0xe8] sm:$0xff]
    %v549 = vld [vmem:[#allocation2 + $0xf0] sm:$0xff]
    %v550 = vld [vmem:[#allocation2 + $0xf8] sm:$0xff]
    %v551 = vld [vmem:[%s4] sm:$0x3]
    %v553 = vperm.slane %v551, 0
    %v554 = vperm.slane %v551, 1
    %v589 = vunpack.c.l.b16 %v519
    %v590 = vunpack.c.h.b16 %v519
    %v591 = vunpack.c.l.b16 %v520
    %v592 = vunpack.c.h.b16 %v520
    %v593 = vunpack.c.l.b16 %v521
    %v594 = vunpack.c.h.b16 %v521
    %v595 = vunpack.c.l.b16 %v522
    %v596 = vunpack.c.h.b16 %v522
    %v597 = vunpack.c.l.b16 %v523
    %v598 = vunpack.c.h.b16 %v523
    %v599 = vunpack.c.l.b16 %v524
    %v600 = vunpack.c.h.b16 %v524
    %v601 = vunpack.c.l.b16 %v525
    %v602 = vunpack.c.h.b16 %v525
    %v603 = vunpack.c.l.b16 %v526
    %v604 = vunpack.c.h.b16 %v526
    %v605 = vunpack.c.l.b16 %v527
    %v606 = vunpack.c.h.b16 %v527
    %v607 = vunpack.c.l.b16 %v528
    %v608 = vunpack.c.h.b16 %v528
    %v609 = vunpack.c.l.b16 %v529
    %v610 = vunpack.c.h.b16 %v529
    %v611 = vunpack.c.l.b16 %v530
    %v612 = vunpack.c.h.b16 %v530
    %v613 = vunpack.c.l.b16 %v531
    %v614 = vunpack.c.h.b16 %v531
    %v615 = vunpack.c.l.b16 %v532
    %v616 = vunpack.c.h.b16 %v532
    %v617 = vunpack.c.l.b16 %v533
    %v618 = vunpack.c.h.b16 %v533
    %v619 = vunpack.c.l.b16 %v534
    %v620 = vunpack.c.h.b16 %v534
    %v621 = vunpack.c.l.b16 %v535
    %v622 = vunpack.c.h.b16 %v535
    %v623 = vunpack.c.l.b16 %v536
    %v624 = vunpack.c.h.b16 %v536
    %v625 = vunpack.c.l.b16 %v537
    %v626 = vunpack.c.h.b16 %v537
    %v627 = vunpack.c.l.b16 %v538
    %v628 = vunpack.c.h.b16 %v538
    %v629 = vunpack.c.l.b16 %v539
    %v630 = vunpack.c.h.b16 %v539
    %v631 = vunpack.c.l.b16 %v540
    %v632 = vunpack.c.h.b16 %v540
    %v633 = vunpack.c.l.b16 %v541
    %v634 = vunpack.c.h.b16 %v541
    %v635 = vunpack.c.l.b16 %v542
    %v636 = vunpack.c.h.b16 %v542
    %v637 = vunpack.c.l.b16 %v543
    %v638 = vunpack.c.h.b16 %v543
    %v639 = vunpack.c.l.b16 %v544
    %v640 = vunpack.c.h.b16 %v544
    %v641 = vunpack.c.l.b16 %v545
    %v642 = vunpack.c.h.b16 %v545
    %v643 = vunpack.c.l.b16 %v546
    %v644 = vunpack.c.h.b16 %v546
    %v645 = vunpack.c.l.b16 %v547
    %v646 = vunpack.c.h.b16 %v547
    %v647 = vunpack.c.l.b16 %v548
    %v648 = vunpack.c.h.b16 %v548
    %v649 = vunpack.c.l.b16 %v549
    %v650 = vunpack.c.h.b16 %v549
    %v651 = vunpack.c.l.b16 %v550
    %v652 = vunpack.c.h.b16 %v550
    %v653 = vpack.c.b16 %v591, %v589
    %v654 = vpack.c.b16 %v592, %v590
    %v655 = vpack.c.b16 %v595, %v593
    %v656 = vpack.c.b16 %v596, %v594
    %v657 = vpack.c.b16 %v599, %v597
    %v658 = vpack.c.b16 %v600, %v598
    %v659 = vpack.c.b16 %v603, %v601
    %v660 = vpack.c.b16 %v604, %v602
    %v661 = vpack.c.b16 %v607, %v605
    %v662 = vpack.c.b16 %v608, %v606
    %v663 = vpack.c.b16 %v611, %v609
    %v664 = vpack.c.b16 %v612, %v610
    %v665 = vpack.c.b16 %v615, %v613
    %v666 = vpack.c.b16 %v616, %v614
    %v667 = vpack.c.b16 %v619, %v617
    %v668 = vpack.c.b16 %v620, %v618
    %v669 = vpack.c.b16 %v623, %v621
    %v670 = vpack.c.b16 %v624, %v622
    %v671 = vpack.c.b16 %v627, %v625
    %v672 = vpack.c.b16 %v628, %v626
    %v673 = vpack.c.b16 %v631, %v629
    %v674 = vpack.c.b16 %v632, %v630
    %v675 = vpack.c.b16 %v635, %v633
    %v676 = vpack.c.b16 %v636, %v634
    %v677 = vpack.c.b16 %v639, %v637
    %v678 = vpack.c.b16 %v640, %v638
    %v679 = vpack.c.b16 %v643, %v641
    %v680 = vpack.c.b16 %v644, %v642
    %v681 = vpack.c.b16 %v647, %v645
    %v682 = vpack.c.b16 %v648, %v646
    %v683 = vpack.c.b16 %v651, %v649
    %v684 = vpack.c.b16 %v652, %v650
    %717 = vmatpush.bf16.msra.mxu0 %v667
    %718 = vmatpush.bf16.msra.mxu0 %v665
    %719 = vmatpush.bf16.msra.mxu0 %v663
    %720 = vmatpush.bf16.msra.mxu0 %v661
    %721 = vmatpush.bf16.msra.mxu0 %v659
    %722 = vmatpush.bf16.msra.mxu0 %v657
    %723 = vmatpush.bf16.msra.mxu0 %v655
    %724 = vmatpush.bf16.msra.mxu0 %v653
    %725 = vmatmul.bf16.gmra.mxu0 %v487
    %v726 = vpop.f32.mrf.mxu0
    %v727 = vadd.f32 %v553, %v726
    %v728 = vpop.f32.mrf.mxu0
    %v729 = vadd.f32 %v553, %v728
    %730 = vmatmul.bf16.gmra.mxu0 %v489
    %v731 = vpop.f32.mrf.mxu0
    %v732 = vadd.f32 %v553, %v731
    %v733 = vpop.f32.mrf.mxu0
    %v734 = vadd.f32 %v553, %v733
    %735 = vmatmul.bf16.gmra.mxu0 %v491
    %v736 = vpop.f32.mrf.mxu0
    %v737 = vadd.f32 %v553, %v736
    %v738 = vpop.f32.mrf.mxu0
    %v739 = vadd.f32 %v553, %v738
    %740 = vmatmul.bf16.gmra.mxu0 %v493
    %v741 = vpop.f32.mrf.mxu0
    %v742 = vadd.f32 %v553, %v741
    %v743 = vpop.f32.mrf.mxu0
    %v744 = vadd.f32 %v553, %v743
    %745 = vmatmul.bf16.gmra.mxu0 %v495
    %v746 = vpop.f32.mrf.mxu0
    %v747 = vadd.f32 %v553, %v746
    %v748 = vpop.f32.mrf.mxu0
    %v749 = vadd.f32 %v553, %v748
    %750 = vmatmul.bf16.gmra.mxu0 %v497
    %v751 = vpop.f32.mrf.mxu0
    %v752 = vadd.f32 %v553, %v751
    %v753 = vpop.f32.mrf.mxu0
    %v754 = vadd.f32 %v553, %v753
    %755 = vmatmul.bf16.gmra.mxu0 %v499
    %v756 = vpop.f32.mrf.mxu0
    %v757 = vadd.f32 %v553, %v756
    %v758 = vpop.f32.mrf.mxu0
    %v759 = vadd.f32 %v553, %v758
    %760 = vmatmul.bf16.gmra.mxu0 %v501
    %v761 = vpop.f32.mrf.mxu0
    %v762 = vadd.f32 %v553, %v761
    %v763 = vpop.f32.mrf.mxu0
    %v764 = vadd.f32 %v553, %v763
    %765 = vmatmul.bf16.gmra.mxu0 %v503
    %v766 = vpop.f32.mrf.mxu0
    %v767 = vadd.f32 %v553, %v766
    %v768 = vpop.f32.mrf.mxu0
    %v769 = vadd.f32 %v553, %v768
    %770 = vmatmul.bf16.gmra.mxu0 %v505
    %v771 = vpop.f32.mrf.mxu0
    %v772 = vadd.f32 %v553, %v771
    %v773 = vpop.f32.mrf.mxu0
    %v774 = vadd.f32 %v553, %v773
    %775 = vmatmul.bf16.gmra.mxu0 %v507
    %v776 = vpop.f32.mrf.mxu0
    %v777 = vadd.f32 %v553, %v776
    %v778 = vpop.f32.mrf.mxu0
    %v779 = vadd.f32 %v553, %v778
    %780 = vmatmul.bf16.gmra.mxu0 %v509
    %v781 = vpop.f32.mrf.mxu0
    %v782 = vadd.f32 %v553, %v781
    %v783 = vpop.f32.mrf.mxu0
    %v784 = vadd.f32 %v553, %v783
    %785 = vmatmul.bf16.gmra.mxu0 %v511
    %v786 = vpop.f32.mrf.mxu0
    %v787 = vadd.f32 %v553, %v786
    %v788 = vpop.f32.mrf.mxu0
    %v789 = vadd.f32 %v553, %v788
    %790 = vmatmul.bf16.gmra.mxu0 %v513
    %v791 = vpop.f32.mrf.mxu0
    %v792 = vadd.f32 %v553, %v791
    %v793 = vpop.f32.mrf.mxu0
    %v794 = vadd.f32 %v553, %v793
    %795 = vmatmul.bf16.gmra.mxu0 %v515
    %v796 = vpop.f32.mrf.mxu0
    %v797 = vadd.f32 %v553, %v796
    %v798 = vpop.f32.mrf.mxu0
    %v799 = vadd.f32 %v553, %v798
    %800 = vmatmul.bf16.gmra.mxu0 %v517
    %v801 = vpop.f32.mrf.mxu0
    %v802 = vadd.f32 %v553, %v801
    %v803 = vpop.f32.mrf.mxu0
    %v804 = vadd.f32 %v553, %v803
    %805 = vdwg.mxu0
    %806 = vmatpush.bf16.msra.mxu0 %v683
    %807 = vmatpush.bf16.msra.mxu0 %v681
    %808 = vmatpush.bf16.msra.mxu0 %v679
    %809 = vmatpush.bf16.msra.mxu0 %v677
    %810 = vmatpush.bf16.msra.mxu0 %v675
    %811 = vmatpush.bf16.msra.mxu0 %v673
    %812 = vmatpush.bf16.msra.mxu0 %v671
    %813 = vmatpush.bf16.msra.mxu0 %v669
    %814 = vmatmul.bf16.gmra.mxu0 %v488
    %v815 = vpop.f32.mrf.mxu0
    %v816 = vadd.f32 %v727, %v815
    %v817 = vpop.f32.mrf.mxu0
    %v818 = vadd.f32 %v729, %v817
    %819 = vmatmul.bf16.gmra.mxu0 %v490
    %v820 = vpop.f32.mrf.mxu0
    %v821 = vadd.f32 %v732, %v820
    %v822 = vpop.f32.mrf.mxu0
    %v823 = vadd.f32 %v734, %v822
    %824 = vmatmul.bf16.gmra.mxu0 %v492
    %v825 = vpop.f32.mrf.mxu0
    %v826 = vadd.f32 %v737, %v825
    %v827 = vpop.f32.mrf.mxu0
    %v828 = vadd.f32 %v739, %v827
    %829 = vmatmul.bf16.gmra.mxu0 %v494
    %v830 = vpop.f32.mrf.mxu0
    %v831 = vadd.f32 %v742, %v830
    %v832 = vpop.f32.mrf.mxu0
    %v833 = vadd.f32 %v744, %v832
    %834 = vmatmul.bf16.gmra.mxu0 %v496
    %v835 = vpop.f32.mrf.mxu0
    %v836 = vadd.f32 %v747, %v835
    %v837 = vpop.f32.mrf.mxu0
    %v838 = vadd.f32 %v749, %v837
    %839 = vmatmul.bf16.gmra.mxu0 %v498
    %v840 = vpop.f32.mrf.mxu0
    %v841 = vadd.f32 %v752, %v840
    %v842 = vpop.f32.mrf.mxu0
    %v843 = vadd.f32 %v754, %v842
    %844 = vmatmul.bf16.gmra.mxu0 %v500
    %v845 = vpop.f32.mrf.mxu0
    %v846 = vadd.f32 %v757, %v845
    %v847 = vpop.f32.mrf.mxu0
    %v848 = vadd.f32 %v759, %v847
    %849 = vmatmul.bf16.gmra.mxu0 %v502
    %v850 = vpop.f32.mrf.mxu0
    %v851 = vadd.f32 %v762, %v850
    %v852 = vpop.f32.mrf.mxu0
    %v853 = vadd.f32 %v764, %v852
    %854 = vmatmul.bf16.gmra.mxu0 %v504
    %v855 = vpop.f32.mrf.mxu0
    %v856 = vadd.f32 %v767, %v855
    %v857 = vpop.f32.mrf.mxu0
    %v858 = vadd.f32 %v769, %v857
    %859 = vmatmul.bf16.gmra.mxu0 %v506
    %v860 = vpop.f32.mrf.mxu0
    %v861 = vadd.f32 %v772, %v860
    %v862 = vpop.f32.mrf.mxu0
    %v863 = vadd.f32 %v774, %v862
    %864 = vmatmul.bf16.gmra.mxu0 %v508
    %v865 = vpop.f32.mrf.mxu0
    %v866 = vadd.f32 %v777, %v865
    %v867 = vpop.f32.mrf.mxu0
    %v868 = vadd.f32 %v779, %v867
    %869 = vmatmul.bf16.gmra.mxu0 %v510
    %v870 = vpop.f32.mrf.mxu0
    %v871 = vadd.f32 %v782, %v870
    %v872 = vpop.f32.mrf.mxu0
    %v873 = vadd.f32 %v784, %v872
    %874 = vmatmul.bf16.gmra.mxu0 %v512
    %v875 = vpop.f32.mrf.mxu0
    %v876 = vadd.f32 %v787, %v875
    %v877 = vpop.f32.mrf.mxu0
    %v878 = vadd.f32 %v789, %v877
    %879 = vmatmul.bf16.gmra.mxu0 %v514
    %v880 = vpop.f32.mrf.mxu0
    %v881 = vadd.f32 %v792, %v880
    %v882 = vpop.f32.mrf.mxu0
    %v883 = vadd.f32 %v794, %v882
    %884 = vmatmul.bf16.gmra.mxu0 %v516
    %v885 = vpop.f32.mrf.mxu0
    %v886 = vadd.f32 %v797, %v885
    %v887 = vpop.f32.mrf.mxu0
    %v888 = vadd.f32 %v799, %v887
    %889 = vmatmul.bf16.gmra.mxu0 %v518
    %v890 = vpop.f32.mrf.mxu0
    %v891 = vadd.f32 %v802, %v890
    %v892 = vpop.f32.mrf.mxu0
    %v893 = vadd.f32 %v804, %v892
    %894 = vdwg.mxu0
    %895 = vmatpush.bf16.msra.mxu0 %v668
    %896 = vmatpush.bf16.msra.mxu0 %v666
    %897 = vmatpush.bf16.msra.mxu0 %v664
    %898 = vmatpush.bf16.msra.mxu0 %v662
    %899 = vmatpush.bf16.msra.mxu0 %v660
    %900 = vmatpush.bf16.msra.mxu0 %v658
    %901 = vmatpush.bf16.msra.mxu0 %v656
    %902 = vmatpush.bf16.msra.mxu0 %v654
    %903 = vmatmul.bf16.gmra.mxu0 %v487
    %v904 = vpop.f32.mrf.mxu0
    %v905 = vadd.f32 %v554, %v904
    %v906 = vpop.f32.mrf.mxu0
    %v907 = vadd.f32 %v554, %v906
    %908 = vmatmul.bf16.gmra.mxu0 %v489
    %v909 = vpop.f32.mrf.mxu0
    %v910 = vadd.f32 %v554, %v909
    %v911 = vpop.f32.mrf.mxu0
    %v912 = vadd.f32 %v554, %v911
    %913 = vmatmul.bf16.gmra.mxu0 %v491
    %v914 = vpop.f32.mrf.mxu0
    %v915 = vadd.f32 %v554, %v914
    %v916 = vpop.f32.mrf.mxu0
    %v917 = vadd.f32 %v554, %v916
    %918 = vmatmul.bf16.gmra.mxu0 %v493
    %v919 = vpop.f32.mrf.mxu0
    %v920 = vadd.f32 %v554, %v919
    %v921 = vpop.f32.mrf.mxu0
    %v922 = vadd.f32 %v554, %v921
    %923 = vmatmul.bf16.gmra.mxu0 %v495
    %v924 = vpop.f32.mrf.mxu0
    %v925 = vadd.f32 %v554, %v924
    %v926 = vpop.f32.mrf.mxu0
    %v927 = vadd.f32 %v554, %v926
    %928 = vmatmul.bf16.gmra.mxu0 %v497
    %v929 = vpop.f32.mrf.mxu0
    %v930 = vadd.f32 %v554, %v929
    %v931 = vpop.f32.mrf.mxu0
    %v932 = vadd.f32 %v554, %v931
    %933 = vmatmul.bf16.gmra.mxu0 %v499
    %v934 = vpop.f32.mrf.mxu0
    %v935 = vadd.f32 %v554, %v934
    %v936 = vpop.f32.mrf.mxu0
    %v937 = vadd.f32 %v554, %v936
    %938 = vmatmul.bf16.gmra.mxu0 %v501
    %v939 = vpop.f32.mrf.mxu0
    %v940 = vadd.f32 %v554, %v939
    %v941 = vpop.f32.mrf.mxu0
    %v942 = vadd.f32 %v554, %v941
    %943 = vmatmul.bf16.gmra.mxu0 %v503
    %v944 = vpop.f32.mrf.mxu0
    %v945 = vadd.f32 %v554, %v944
    %v946 = vpop.f32.mrf.mxu0
    %v947 = vadd.f32 %v554, %v946
    %948 = vmatmul.bf16.gmra.mxu0 %v505
    %v949 = vpop.f32.mrf.mxu0
    %v950 = vadd.f32 %v554, %v949
    %v951 = vpop.f32.mrf.mxu0
    %v952 = vadd.f32 %v554, %v951
    %953 = vmatmul.bf16.gmra.mxu0 %v507
    %v954 = vpop.f32.mrf.mxu0
    %v955 = vadd.f32 %v554, %v954
    %v956 = vpop.f32.mrf.mxu0
    %v957 = vadd.f32 %v554, %v956
    %958 = vmatmul.bf16.gmra.mxu0 %v509
    %v959 = vpop.f32.mrf.mxu0
    %v960 = vadd.f32 %v554, %v959
    %v961 = vpop.f32.mrf.mxu0
    %v962 = vadd.f32 %v554, %v961
    %963 = vmatmul.bf16.gmra.mxu0 %v511
    %v964 = vpop.f32.mrf.mxu0
    %v965 = vadd.f32 %v554, %v964
    %v966 = vpop.f32.mrf.mxu0
    %v967 = vadd.f32 %v554, %v966
    %968 = vmatmul.bf16.gmra.mxu0 %v513
    %v969 = vpop.f32.mrf.mxu0
    %v970 = vadd.f32 %v554, %v969
    %v971 = vpop.f32.mrf.mxu0
    %v972 = vadd.f32 %v554, %v971
    %973 = vmatmul.bf16.gmra.mxu0 %v515
    %v974 = vpop.f32.mrf.mxu0
    %v975 = vadd.f32 %v554, %v974
    %v976 = vpop.f32.mrf.mxu0
    %v977 = vadd.f32 %v554, %v976
    %978 = vmatmul.bf16.gmra.mxu0 %v517
    %v979 = vpop.f32.mrf.mxu0
    %v980 = vadd.f32 %v554, %v979
    %v981 = vpop.f32.mrf.mxu0
    %v982 = vadd.f32 %v554, %v981
    %983 = vdwg.mxu0
    %984 = vmatpush.bf16.msra.mxu0 %v684
    %985 = vmatpush.bf16.msra.mxu0 %v682
    %986 = vmatpush.bf16.msra.mxu0 %v680
    %987 = vmatpush.bf16.msra.mxu0 %v678
    %988 = vmatpush.bf16.msra.mxu0 %v676
    %989 = vmatpush.bf16.msra.mxu0 %v674
    %990 = vmatpush.bf16.msra.mxu0 %v672
    %991 = vmatpush.bf16.msra.mxu0 %v670
    %992 = vmatmul.bf16.gmra.mxu0 %v488
    %v993 = vpop.f32.mrf.mxu0
    %v994 = vadd.f32 %v905, %v993
    %v995 = vpop.f32.mrf.mxu0
    %v996 = vadd.f32 %v907, %v995
    %997 = vmatmul.bf16.gmra.mxu0 %v490
    %v998 = vpop.f32.mrf.mxu0
    %v999 = vadd.f32 %v910, %v998
    %v1000 = vpop.f32.mrf.mxu0
    %v1001 = vadd.f32 %v912, %v1000
    %1002 = vmatmul.bf16.gmra.mxu0 %v492
    %v1003 = vpop.f32.mrf.mxu0
    %v1004 = vadd.f32 %v915, %v1003
    %v1005 = vpop.f32.mrf.mxu0
    %v1006 = vadd.f32 %v917, %v1005
    %1007 = vmatmul.bf16.gmra.mxu0 %v494
    %v1008 = vpop.f32.mrf.mxu0
    %v1009 = vadd.f32 %v920, %v1008
    %v1010 = vpop.f32.mrf.mxu0
    %v1011 = vadd.f32 %v922, %v1010
    %1012 = vmatmul.bf16.gmra.mxu0 %v496
    %v1013 = vpop.f32.mrf.mxu0
    %v1014 = vadd.f32 %v925, %v1013
    %v1015 = vpop.f32.mrf.mxu0
    %v1016 = vadd.f32 %v927, %v1015
    %1017 = vmatmul.bf16.gmra.mxu0 %v498
    %v1018 = vpop.f32.mrf.mxu0
    %v1019 = vadd.f32 %v930, %v1018
    %v1020 = vpop.f32.mrf.mxu0
    %v1021 = vadd.f32 %v932, %v1020
    %1022 = vmatmul.bf16.gmra.mxu0 %v500
    %v1023 = vpop.f32.mrf.mxu0
    %v1024 = vadd.f32 %v935, %v1023
    %v1025 = vpop.f32.mrf.mxu0
    %v1026 = vadd.f32 %v937, %v1025
    %1027 = vmatmul.bf16.gmra.mxu0 %v502
    %v1028 = vpop.f32.mrf.mxu0
    %v1029 = vadd.f32 %v940, %v1028
    %v1030 = vpop.f32.mrf.mxu0
    %v1031 = vadd.f32 %v942, %v1030
    %1032 = vmatmul.bf16.gmra.mxu0 %v504
    %v1033 = vpop.f32.mrf.mxu0
    %v1034 = vadd.f32 %v945, %v1033
    %v1035 = vpop.f32.mrf.mxu0
    %v1036 = vadd.f32 %v947, %v1035
    %1037 = vmatmul.bf16.gmra.mxu0 %v506
    %v1038 = vpop.f32.mrf.mxu0
    %v1039 = vadd.f32 %v950, %v1038
    %v1040 = vpop.f32.mrf.mxu0
    %v1041 = vadd.f32 %v952, %v1040
    %1042 = vmatmul.bf16.gmra.mxu0 %v508
    %v1043 = vpop.f32.mrf.mxu0
    %v1044 = vadd.f32 %v955, %v1043
    %v1045 = vpop.f32.mrf.mxu0
    %v1046 = vadd.f32 %v957, %v1045
    %1047 = vmatmul.bf16.gmra.mxu0 %v510
    %v1048 = vpop.f32.mrf.mxu0
    %v1049 = vadd.f32 %v960, %v1048
    %v1050 = vpop.f32.mrf.mxu0
    %v1051 = vadd.f32 %v962, %v1050
    %1052 = vmatmul.bf16.gmra.mxu0 %v512
    %v1053 = vpop.f32.mrf.mxu0
    %v1054 = vadd.f32 %v965, %v1053
    %v1055 = vpop.f32.mrf.mxu0
    %v1056 = vadd.f32 %v967, %v1055
    %1057 = vmatmul.bf16.gmra.mxu0 %v514
    %v1058 = vpop.f32.mrf.mxu0
    %v1059 = vadd.f32 %v970, %v1058
    %v1060 = vpop.f32.mrf.mxu0
    %v1061 = vadd.f32 %v972, %v1060
    %1062 = vmatmul.bf16.gmra.mxu0 %v516
    %v1063 = vpop.f32.mrf.mxu0
    %v1064 = vadd.f32 %v975, %v1063
    %v1065 = vpop.f32.mrf.mxu0
    %v1066 = vadd.f32 %v977, %v1065
    %1067 = vmatmul.bf16.gmra.mxu0 %v518
    %v1068 = vpop.f32.mrf.mxu0
    %v1069 = vadd.f32 %v980, %v1068
    %v1070 = vpop.f32.mrf.mxu0
    %v1071 = vadd.f32 %v982, %v1070
    %1072 = vdwg.mxu0
    %v1073 = vmax.f32 %v816, 0.0
    %v1074 = vmax.f32 %v994, 0.0
    %v1075 = vmax.f32 %v818, 0.0
    %v1076 = vmax.f32 %v996, 0.0
    %v1077 = vmax.f32 %v821, 0.0
    %v1078 = vmax.f32 %v999, 0.0
    %v1079 = vmax.f32 %v823, 0.0
    %v1080 = vmax.f32 %v1001, 0.0
    %v1081 = vmax.f32 %v826, 0.0
    %v1082 = vmax.f32 %v1004, 0.0
    %v1083 = vmax.f32 %v828, 0.0
    %v1084 = vmax.f32 %v1006, 0.0
    %v1085 = vmax.f32 %v831, 0.0
    %v1086 = vmax.f32 %v1009, 0.0
    %v1087 = vmax.f32 %v833, 0.0
    %v1088 = vmax.f32 %v1011, 0.0
    %v1089 = vmax.f32 %v836, 0.0
    %v1090 = vmax.f32 %v1014, 0.0
    %v1091 = vmax.f32 %v838, 0.0
    %v1092 = vmax.f32 %v1016, 0.0
    %v1093 = vmax.f32 %v841, 0.0
    %v1094 = vmax.f32 %v1019, 0.0
    %v1095 = vmax.f32 %v843, 0.0
    %v1096 = vmax.f32 %v1021, 0.0
    %v1097 = vmax.f32 %v846, 0.0
    %v1098 = vmax.f32 %v1024, 0.0
    %v1099 = vmax.f32 %v848, 0.0
    %v1100 = vmax.f32 %v1026, 0.0
    %v1101 = vmax.f32 %v851, 0.0
    %v1102 = vmax.f32 %v1029, 0.0
    %v1103 = vmax.f32 %v853, 0.0
    %v1104 = vmax.f32 %v1031, 0.0
    %v1105 = vmax.f32 %v856, 0.0
    %v1106 = vmax.f32 %v1034, 0.0
    %v1107 = vmax.f32 %v858, 0.0
    %v1108 = vmax.f32 %v1036, 0.0
    %v1109 = vmax.f32 %v861, 0.0
    %v1110 = vmax.f32 %v1039, 0.0
    %v1111 = vmax.f32 %v863, 0.0
    %v1112 = vmax.f32 %v1041, 0.0
    %v1113 = vmax.f32 %v866, 0.0
    %v1114 = vmax.f32 %v1044, 0.0
    %v1115 = vmax.f32 %v868, 0.0
    %v1116 = vmax.f32 %v1046, 0.0
    %v1117 = vmax.f32 %v871, 0.0
    %v1118 = vmax.f32 %v1049, 0.0
    %v1119 = vmax.f32 %v873, 0.0
    %v1120 = vmax.f32 %v1051, 0.0
    %v1121 = vmax.f32 %v876, 0.0
    %v1122 = vmax.f32 %v1054, 0.0
    %v1123 = vmax.f32 %v878, 0.0
    %v1124 = vmax.f32 %v1056, 0.0
    %v1125 = vmax.f32 %v881, 0.0
    %v1126 = vmax.f32 %v1059, 0.0
    %v1127 = vmax.f32 %v883, 0.0
    %v1128 = vmax.f32 %v1061, 0.0
    %v1129 = vmax.f32 %v886, 0.0
    %v1130 = vmax.f32 %v1064, 0.0
    %v1131 = vmax.f32 %v888, 0.0
    %v1132 = vmax.f32 %v1066, 0.0
    %v1133 = vmax.f32 %v891, 0.0
    %v1134 = vmax.f32 %v1069, 0.0
    %v1135 = vmax.f32 %v893, 0.0
    %v1136 = vmax.f32 %v1071, 0.0
    %v1137 = vpack.c.bf16 %v1075, %v1073
    %v1138 = vpack.c.bf16 %v1076, %v1074
    %v1139 = vpack.c.bf16 %v1079, %v1077
    %v1140 = vpack.c.bf16 %v1080, %v1078
    %v1141 = vpack.c.bf16 %v1083, %v1081
    %v1142 = vpack.c.bf16 %v1084, %v1082
    %v1143 = vpack.c.bf16 %v1087, %v1085
    %v1144 = vpack.c.bf16 %v1088, %v1086
    %v1145 = vpack.c.bf16 %v1091, %v1089
    %v1146 = vpack.c.bf16 %v1092, %v1090
    %v1147 = vpack.c.bf16 %v1095, %v1093
    %v1148 = vpack.c.bf16 %v1096, %v1094
    %v1149 = vpack.c.bf16 %v1099, %v1097
    %v1150 = vpack.c.bf16 %v1100, %v1098
    %v1151 = vpack.c.bf16 %v1103, %v1101
    %v1152 = vpack.c.bf16 %v1104, %v1102
    %v1153 = vpack.c.bf16 %v1107, %v1105
    %v1154 = vpack.c.bf16 %v1108, %v1106
    %v1155 = vpack.c.bf16 %v1111, %v1109
    %v1156 = vpack.c.bf16 %v1112, %v1110
    %v1157 = vpack.c.bf16 %v1115, %v1113
    %v1158 = vpack.c.bf16 %v1116, %v1114
    %v1159 = vpack.c.bf16 %v1119, %v1117
    %v1160 = vpack.c.bf16 %v1120, %v1118
    %v1161 = vpack.c.bf16 %v1123, %v1121
    %v1162 = vpack.c.bf16 %v1124, %v1122
    %v1163 = vpack.c.bf16 %v1127, %v1125
    %v1164 = vpack.c.bf16 %v1128, %v1126
    %v1165 = vpack.c.bf16 %v1131, %v1129
    %v1166 = vpack.c.bf16 %v1132, %v1130
    %v1167 = vpack.c.bf16 %v1135, %v1133
    %v1168 = vpack.c.bf16 %v1136, %v1134
    %v1169 = vld [vmem:[%s5] sm:$0xf]
    %v1170 = vld [vmem:[%s5 + $0x4] sm:$0xf]
    %v1171 = vld [vmem:[%s5 + $0x8] sm:$0xf]
    %v1172 = vld [vmem:[%s5 + $0xc] sm:$0xf]
    %v1173 = vld [vmem:[%s5 + $0x10] sm:$0xf]
    %v1174 = vld [vmem:[%s5 + $0x14] sm:$0xf]
    %v1175 = vld [vmem:[%s5 + $0x18] sm:$0xf]
    %v1176 = vld [vmem:[%s5 + $0x1c] sm:$0xf]
    %v1177 = vld [vmem:[%s5 + $0x20] sm:$0xf]
    %v1178 = vld [vmem:[%s5 + $0x24] sm:$0xf]
    %v1179 = vld [vmem:[%s5 + $0x28] sm:$0xf]
    %v1180 = vld [vmem:[%s5 + $0x2c] sm:$0xf]
    %v1181 = vld [vmem:[%s5 + $0x30] sm:$0xf]
    %v1182 = vld [vmem:[%s5 + $0x34] sm:$0xf]
    %v1183 = vld [vmem:[%s5 + $0x38] sm:$0xf]
    %v1184 = vld [vmem:[%s5 + $0x3c] sm:$0xf]
    %v1185 = vld [vmem:[%s5 + $0x40] sm:$0xf]
    %v1186 = vld [vmem:[%s5 + $0x44] sm:$0xf]
    %v1187 = vld [vmem:[%s5 + $0x48] sm:$0xf]
    %v1188 = vld [vmem:[%s5 + $0x4c] sm:$0xf]
    %v1189 = vld [vmem:[%s5 + $0x50] sm:$0xf]
    %v1190 = vld [vmem:[%s5 + $0x54] sm:$0xf]
    %v1191 = vld [vmem:[%s5 + $0x58] sm:$0xf]
    %v1192 = vld [vmem:[%s5 + $0x5c] sm:$0xf]
    %v1193 = vld [vmem:[%s5 + $0x60] sm:$0xf]
    %v1194 = vld [vmem:[%s5 + $0x64] sm:$0xf]
    %v1195 = vld [vmem:[%s5 + $0x68] sm:$0xf]
    %v1196 = vld [vmem:[%s5 + $0x6c] sm:$0xf]
    %v1197 = vld [vmem:[%s5 + $0x70] sm:$0xf]
    %v1198 = vld [vmem:[%s5 + $0x74] sm:$0xf]
    %v1199 = vld [vmem:[%s5 + $0x78] sm:$0xf]
    %v1200 = vld [vmem:[%s5 + $0x7c] sm:$0xf]
    %v1201 = vld [vmem:[%s6] sm:$0x1]
    %v1203 = vperm.slane %v1201, 0
    %v1237 = vunpack.c.l.b16 %v1169
    %v1238 = vunpack.c.l.b16 %v1170
    %v1239 = vunpack.c.l.b16 %v1171
    %v1240 = vunpack.c.l.b16 %v1172
    %v1241 = vunpack.c.l.b16 %v1173
    %v1242 = vunpack.c.l.b16 %v1174
    %v1243 = vunpack.c.l.b16 %v1175
    %v1244 = vunpack.c.l.b16 %v1176
    %v1245 = vunpack.c.l.b16 %v1177
    %v1246 = vunpack.c.l.b16 %v1178
    %v1247 = vunpack.c.l.b16 %v1179
    %v1248 = vunpack.c.l.b16 %v1180
    %v1249 = vunpack.c.l.b16 %v1181
    %v1250 = vunpack.c.l.b16 %v1182
    %v1251 = vunpack.c.l.b16 %v1183
    %v1252 = vunpack.c.l.b16 %v1184
    %v1253 = vunpack.c.l.b16 %v1185
    %v1254 = vunpack.c.l.b16 %v1186
    %v1255 = vunpack.c.l.b16 %v1187
    %v1256 = vunpack.c.l.b16 %v1188
    %v1257 = vunpack.c.l.b16 %v1189
    %v1258 = vunpack.c.l.b16 %v1190
    %v1259 = vunpack.c.l.b16 %v1191
    %v1260 = vunpack.c.l.b16 %v1192
    %v1261 = vunpack.c.l.b16 %v1193
    %v1262 = vunpack.c.l.b16 %v1194
    %v1263 = vunpack.c.l.b16 %v1195
    %v1264 = vunpack.c.l.b16 %v1196
    %v1265 = vunpack.c.l.b16 %v1197
    %v1266 = vunpack.c.l.b16 %v1198
    %v1267 = vunpack.c.l.b16 %v1199
    %v1268 = vunpack.c.l.b16 %v1200
    %v1269 = vpack.c.b16 %v1238, %v1237
    %v1270 = vpack.c.b16 %v1240, %v1239
    %v1271 = vpack.c.b16 %v1242, %v1241
    %v1272 = vpack.c.b16 %v1244, %v1243
    %v1273 = vpack.c.b16 %v1246, %v1245
    %v1274 = vpack.c.b16 %v1248, %v1247
    %v1275 = vpack.c.b16 %v1250, %v1249
    %v1276 = vpack.c.b16 %v1252, %v1251
    %v1277 = vpack.c.b16 %v1254, %v1253
    %v1278 = vpack.c.b16 %v1256, %v1255
    %v1279 = vpack.c.b16 %v1258, %v1257
    %v1280 = vpack.c.b16 %v1260, %v1259
    %v1281 = vpack.c.b16 %v1262, %v1261
    %v1282 = vpack.c.b16 %v1264, %v1263
    %v1283 = vpack.c.b16 %v1266, %v1265
    %v1284 = vpack.c.b16 %v1268, %v1267
    %1301 = vmatpush.bf16.msra.mxu0 %v1276
    %1302 = vmatpush.bf16.msra.mxu0 %v1275
    %1303 = vmatpush.bf16.msra.mxu0 %v1274
    %1304 = vmatpush.bf16.msra.mxu0 %v1273
    %1305 = vmatpush.bf16.msra.mxu0 %v1272
    %1306 = vmatpush.bf16.msra.mxu0 %v1271
    %1307 = vmatpush.bf16.msra.mxu0 %v1270
    %1308 = vmatpush.bf16.msra.mxu0 %v1269
    %1309 = vmatmul.bf16.gmra.mxu0 %v1137
    %v1310 = vpop.f32.mrf.mxu0
    %v1311 = vadd.f32 %v1203, %v1310
    %v1312 = vpop.f32.mrf.mxu0
    %v1313 = vadd.f32 %v1203, %v1312
    %1314 = vmatmul.bf16.gmra.mxu0 %v1139
    %v1315 = vpop.f32.mrf.mxu0
    %v1316 = vadd.f32 %v1203, %v1315
    %v1317 = vpop.f32.mrf.mxu0
    %v1318 = vadd.f32 %v1203, %v1317
    %1319 = vmatmul.bf16.gmra.mxu0 %v1141
    %v1320 = vpop.f32.mrf.mxu0
    %v1321 = vadd.f32 %v1203, %v1320
    %v1322 = vpop.f32.mrf.mxu0
    %v1323 = vadd.f32 %v1203, %v1322
    %1324 = vmatmul.bf16.gmra.mxu0 %v1143
    %v1325 = vpop.f32.mrf.mxu0
    %v1326 = vadd.f32 %v1203, %v1325
    %v1327 = vpop.f32.mrf.mxu0
    %v1328 = vadd.f32 %v1203, %v1327
    %1329 = vmatmul.bf16.gmra.mxu0 %v1145
    %v1330 = vpop.f32.mrf.mxu0
    %v1331 = vadd.f32 %v1203, %v1330
    %v1332 = vpop.f32.mrf.mxu0
    %v1333 = vadd.f32 %v1203, %v1332
    %1334 = vmatmul.bf16.gmra.mxu0 %v1147
    %v1335 = vpop.f32.mrf.mxu0
    %v1336 = vadd.f32 %v1203, %v1335
    %v1337 = vpop.f32.mrf.mxu0
    %v1338 = vadd.f32 %v1203, %v1337
    %1339 = vmatmul.bf16.gmra.mxu0 %v1149
    %v1340 = vpop.f32.mrf.mxu0
    %v1341 = vadd.f32 %v1203, %v1340
    %v1342 = vpop.f32.mrf.mxu0
    %v1343 = vadd.f32 %v1203, %v1342
    %1344 = vmatmul.bf16.gmra.mxu0 %v1151
    %v1345 = vpop.f32.mrf.mxu0
    %v1346 = vadd.f32 %v1203, %v1345
    %v1347 = vpop.f32.mrf.mxu0
    %v1348 = vadd.f32 %v1203, %v1347
    %1349 = vmatmul.bf16.gmra.mxu0 %v1153
    %v1350 = vpop.f32.mrf.mxu0
    %v1351 = vadd.f32 %v1203, %v1350
    %v1352 = vpop.f32.mrf.mxu0
    %v1353 = vadd.f32 %v1203, %v1352
    %1354 = vmatmul.bf16.gmra.mxu0 %v1155
    %v1355 = vpop.f32.mrf.mxu0
    %v1356 = vadd.f32 %v1203, %v1355
    %v1357 = vpop.f32.mrf.mxu0
    %v1358 = vadd.f32 %v1203, %v1357
    %1359 = vmatmul.bf16.gmra.mxu0 %v1157
    %v1360 = vpop.f32.mrf.mxu0
    %v1361 = vadd.f32 %v1203, %v1360
    %v1362 = vpop.f32.mrf.mxu0
    %v1363 = vadd.f32 %v1203, %v1362
    %1364 = vmatmul.bf16.gmra.mxu0 %v1159
    %v1365 = vpop.f32.mrf.mxu0
    %v1366 = vadd.f32 %v1203, %v1365
    %v1367 = vpop.f32.mrf.mxu0
    %v1368 = vadd.f32 %v1203, %v1367
    %1369 = vmatmul.bf16.gmra.mxu0 %v1161
    %v1370 = vpop.f32.mrf.mxu0
    %v1371 = vadd.f32 %v1203, %v1370
    %v1372 = vpop.f32.mrf.mxu0
    %v1373 = vadd.f32 %v1203, %v1372
    %1374 = vmatmul.bf16.gmra.mxu0 %v1163
    %v1375 = vpop.f32.mrf.mxu0
    %v1376 = vadd.f32 %v1203, %v1375
    %v1377 = vpop.f32.mrf.mxu0
    %v1378 = vadd.f32 %v1203, %v1377
    %1379 = vmatmul.bf16.gmra.mxu0 %v1165
    %v1380 = vpop.f32.mrf.mxu0
    %v1381 = vadd.f32 %v1203, %v1380
    %v1382 = vpop.f32.mrf.mxu0
    %v1383 = vadd.f32 %v1203, %v1382
    %1384 = vmatmul.bf16.gmra.mxu0 %v1167
    %v1385 = vpop.f32.mrf.mxu0
    %v1386 = vadd.f32 %v1203, %v1385
    %v1387 = vpop.f32.mrf.mxu0
    %v1388 = vadd.f32 %v1203, %v1387
    %1389 = vdwg.mxu0
    %1390 = vmatpush.bf16.msra.mxu0 %v1284
    %1391 = vmatpush.bf16.msra.mxu0 %v1283
    %1392 = vmatpush.bf16.msra.mxu0 %v1282
    %1393 = vmatpush.bf16.msra.mxu0 %v1281
    %1394 = vmatpush.bf16.msra.mxu0 %v1280
    %1395 = vmatpush.bf16.msra.mxu0 %v1279
    %1396 = vmatpush.bf16.msra.mxu0 %v1278
    %1397 = vmatpush.bf16.msra.mxu0 %v1277
    %1398 = vmatmul.bf16.gmra.mxu0 %v1138
    %v1399 = vpop.f32.mrf.mxu0
    %v1400 = vadd.f32 %v1311, %v1399
    %v1401 = vpop.f32.mrf.mxu0
    %v1402 = vadd.f32 %v1313, %v1401
    %1403 = vmatmul.bf16.gmra.mxu0 %v1140
    %v1404 = vpop.f32.mrf.mxu0
    %v1405 = vadd.f32 %v1316, %v1404
    %v1406 = vpop.f32.mrf.mxu0
    %v1407 = vadd.f32 %v1318, %v1406
    %1408 = vmatmul.bf16.gmra.mxu0 %v1142
    %v1409 = vpop.f32.mrf.mxu0
    %v1410 = vadd.f32 %v1321, %v1409
    %v1411 = vpop.f32.mrf.mxu0
    %v1412 = vadd.f32 %v1323, %v1411
    %1413 = vmatmul.bf16.gmra.mxu0 %v1144
    %v1414 = vpop.f32.mrf.mxu0
    %v1415 = vadd.f32 %v1326, %v1414
    %v1416 = vpop.f32.mrf.mxu0
    %v1417 = vadd.f32 %v1328, %v1416
    %1418 = vmatmul.bf16.gmra.mxu0 %v1146
    %v1419 = vpop.f32.mrf.mxu0
    %v1420 = vadd.f32 %v1331, %v1419
    %v1421 = vpop.f32.mrf.mxu0
    %v1422 = vadd.f32 %v1333, %v1421
    %1423 = vmatmul.bf16.gmra.mxu0 %v1148
    %v1424 = vpop.f32.mrf.mxu0
    %v1425 = vadd.f32 %v1336, %v1424
    %v1426 = vpop.f32.mrf.mxu0
    %v1427 = vadd.f32 %v1338, %v1426
    %1428 = vmatmul.bf16.gmra.mxu0 %v1150
    %v1429 = vpop.f32.mrf.mxu0
    %v1430 = vadd.f32 %v1341, %v1429
    %v1431 = vpop.f32.mrf.mxu0
    %v1432 = vadd.f32 %v1343, %v1431
    %1433 = vmatmul.bf16.gmra.mxu0 %v1152
    %v1434 = vpop.f32.mrf.mxu0
    %v1435 = vadd.f32 %v1346, %v1434
    %v1436 = vpop.f32.mrf.mxu0
    %v1437 = vadd.f32 %v1348, %v1436
    %1438 = vmatmul.bf16.gmra.mxu0 %v1154
    %v1439 = vpop.f32.mrf.mxu0
    %v1440 = vadd.f32 %v1351, %v1439
    %v1441 = vpop.f32.mrf.mxu0
    %v1442 = vadd.f32 %v1353, %v1441
    %1443 = vmatmul.bf16.gmra.mxu0 %v1156
    %v1444 = vpop.f32.mrf.mxu0
    %v1445 = vadd.f32 %v1356, %v1444
    %v1446 = vpop.f32.mrf.mxu0
    %v1447 = vadd.f32 %v1358, %v1446
    %1448 = vmatmul.bf16.gmra.mxu0 %v1158
    %v1449 = vpop.f32.mrf.mxu0
    %v1450 = vadd.f32 %v1361, %v1449
    %v1451 = vpop.f32.mrf.mxu0
    %v1452 = vadd.f32 %v1363, %v1451
    %1453 = vmatmul.bf16.gmra.mxu0 %v1160
    %v1454 = vpop.f32.mrf.mxu0
    %v1455 = vadd.f32 %v1366, %v1454
    %v1456 = vpop.f32.mrf.mxu0
    %v1457 = vadd.f32 %v1368, %v1456
    %1458 = vmatmul.bf16.gmra.mxu0 %v1162
    %v1459 = vpop.f32.mrf.mxu0
    %v1460 = vadd.f32 %v1371, %v1459
    %v1461 = vpop.f32.mrf.mxu0
    %v1462 = vadd.f32 %v1373, %v1461
    %1463 = vmatmul.bf16.gmra.mxu0 %v1164
    %v1464 = vpop.f32.mrf.mxu0
    %v1465 = vadd.f32 %v1376, %v1464
    %v1466 = vpop.f32.mrf.mxu0
    %v1467 = vadd.f32 %v1378, %v1466
    %1468 = vmatmul.bf16.gmra.mxu0 %v1166
    %v1469 = vpop.f32.mrf.mxu0
    %v1470 = vadd.f32 %v1381, %v1469
    %v1471 = vpop.f32.mrf.mxu0
    %v1472 = vadd.f32 %v1383, %v1471
    %1473 = vmatmul.bf16.gmra.mxu0 %v1168
    %v1474 = vpop.f32.mrf.mxu0
    %v1475 = vadd.f32 %v1386, %v1474
    %v1476 = vpop.f32.mrf.mxu0
    %v1477 = vadd.f32 %v1388, %v1476
    %1478 = vdwg.mxu0
    %v1479 = vmax.f32 %v1400, 0.0
    %v1480 = vmax.f32 %v1402, 0.0
    %v1481 = vmax.f32 %v1405, 0.0
    %v1482 = vmax.f32 %v1407, 0.0
    %v1483 = vmax.f32 %v1410, 0.0
    %v1484 = vmax.f32 %v1412, 0.0
    %v1485 = vmax.f32 %v1415, 0.0
    %v1486 = vmax.f32 %v1417, 0.0
    %v1487 = vmax.f32 %v1420, 0.0
    %v1488 = vmax.f32 %v1422, 0.0
    %v1489 = vmax.f32 %v1425, 0.0
    %v1490 = vmax.f32 %v1427, 0.0
    %v1491 = vmax.f32 %v1430, 0.0
    %v1492 = vmax.f32 %v1432, 0.0
    %v1493 = vmax.f32 %v1435, 0.0
    %v1494 = vmax.f32 %v1437, 0.0
    %v1495 = vmax.f32 %v1440, 0.0
    %v1496 = vmax.f32 %v1442, 0.0
    %v1497 = vmax.f32 %v1445, 0.0
    %v1498 = vmax.f32 %v1447, 0.0
    %v1499 = vmax.f32 %v1450, 0.0
    %v1500 = vmax.f32 %v1452, 0.0
    %v1501 = vmax.f32 %v1455, 0.0
    %v1502 = vmax.f32 %v1457, 0.0
    %v1503 = vmax.f32 %v1460, 0.0
    %v1504 = vmax.f32 %v1462, 0.0
    %v1505 = vmax.f32 %v1465, 0.0
    %v1506 = vmax.f32 %v1467, 0.0
    %v1507 = vmax.f32 %v1470, 0.0
    %v1508 = vmax.f32 %v1472, 0.0
    %v1509 = vmax.f32 %v1475, 0.0
    %v1510 = vmax.f32 %v1477, 0.0
    %v1511 = vpack.c.bf16 %v1480, %v1479
    %v1512 = vpack.c.bf16 %v1482, %v1481
    %v1513 = vpack.c.bf16 %v1484, %v1483
    %v1514 = vpack.c.bf16 %v1486, %v1485
    %v1515 = vpack.c.bf16 %v1488, %v1487
    %v1516 = vpack.c.bf16 %v1490, %v1489
    %v1517 = vpack.c.bf16 %v1492, %v1491
    %v1518 = vpack.c.bf16 %v1494, %v1493
    %v1519 = vpack.c.bf16 %v1496, %v1495
    %v1520 = vpack.c.bf16 %v1498, %v1497
    %v1521 = vpack.c.bf16 %v1500, %v1499
    %v1522 = vpack.c.bf16 %v1502, %v1501
    %v1523 = vpack.c.bf16 %v1504, %v1503
    %v1524 = vpack.c.bf16 %v1506, %v1505
    %v1525 = vpack.c.bf16 %v1508, %v1507
    %v1526 = vpack.c.bf16 %v1510, %v1509
    %v1527 = vld [vmem:[#allocation5] sm:$0xf]
    %v1528 = vld [vmem:[#allocation5 + $0x4] sm:$0xf]
    %v1529 = vld [vmem:[#allocation5 + $0x8] sm:$0xf]
    %v1530 = vld [vmem:[#allocation5 + $0xc] sm:$0xf]
    %v1531 = vld [vmem:[#allocation5 + $0x10] sm:$0xf]
    %v1532 = vld [vmem:[#allocation5 + $0x14] sm:$0xf]
    %v1533 = vld [vmem:[#allocation5 + $0x18] sm:$0xf]
    %v1534 = vld [vmem:[#allocation5 + $0x1c] sm:$0xf]
    %v1535 = vld [vmem:[#allocation5 + $0x20] sm:$0xf]
    %v1536 = vld [vmem:[#allocation5 + $0x24] sm:$0xf]
    %v1537 = vld [vmem:[#allocation5 + $0x28] sm:$0xf]
    %v1538 = vld [vmem:[#allocation5 + $0x2c] sm:$0xf]
    %v1539 = vld [vmem:[#allocation5 + $0x30] sm:$0xf]
    %v1540 = vld [vmem:[#allocation5 + $0x34] sm:$0xf]
    %v1541 = vld [vmem:[#allocation5 + $0x38] sm:$0xf]
    %v1542 = vld [vmem:[#allocation5 + $0x3c] sm:$0xf]
    %v1543 = vld [vmem:[%s8] sm:$0x1]
    %v1545 = vperm.slane %v1543, 0
    %v1563 = vunpack.c.l.b16 %v1527
    %v1564 = vunpack.c.l.b16 %v1528
    %v1565 = vunpack.c.l.b16 %v1529
    %v1566 = vunpack.c.l.b16 %v1530
    %v1567 = vunpack.c.l.b16 %v1531
    %v1568 = vunpack.c.l.b16 %v1532
    %v1569 = vunpack.c.l.b16 %v1533
    %v1570 = vunpack.c.l.b16 %v1534
    %v1571 = vunpack.c.l.b16 %v1535
    %v1572 = vunpack.c.l.b16 %v1536
    %v1573 = vunpack.c.l.b16 %v1537
    %v1574 = vunpack.c.l.b16 %v1538
    %v1575 = vunpack.c.l.b16 %v1539
    %v1576 = vunpack.c.l.b16 %v1540
    %v1577 = vunpack.c.l.b16 %v1541
    %v1578 = vunpack.c.l.b16 %v1542
    %v1579 = vpack.c.b16 %v1564, %v1563
    %v1580 = vpack.c.b16 %v1566, %v1565
    %v1581 = vpack.c.b16 %v1568, %v1567
    %v1582 = vpack.c.b16 %v1570, %v1569
    %v1583 = vpack.c.b16 %v1572, %v1571
    %v1584 = vpack.c.b16 %v1574, %v1573
    %v1585 = vpack.c.b16 %v1576, %v1575
    %v1586 = vpack.c.b16 %v1578, %v1577
    %1595 = vmatpush.bf16.msra.mxu0 %v1586
    %1596 = vmatpush.bf16.msra.mxu0 %v1585
    %1597 = vmatpush.bf16.msra.mxu0 %v1584
    %1598 = vmatpush.bf16.msra.mxu0 %v1583
    %1599 = vmatpush.bf16.msra.mxu0 %v1582
    %1600 = vmatpush.bf16.msra.mxu0 %v1581
    %1601 = vmatpush.bf16.msra.mxu0 %v1580
    %1602 = vmatpush.bf16.msra.mxu0 %v1579
    %1603 = vmatmul.bf16.gmra.mxu0 %v1511
    %v1604 = vpop.f32.mrf.mxu0
    %v1605 = vadd.f32 %v1545, %v1604
    %v1606 = vpop.f32.mrf.mxu0
    %v1607 = vadd.f32 %v1545, %v1606
    %1608 = vmatmul.bf16.gmra.mxu0 %v1512
    %v1609 = vpop.f32.mrf.mxu0
    %v1610 = vadd.f32 %v1545, %v1609
    %v1611 = vpop.f32.mrf.mxu0
    %v1612 = vadd.f32 %v1545, %v1611
    %1613 = vmatmul.bf16.gmra.mxu0 %v1513
    %v1614 = vpop.f32.mrf.mxu0
    %v1615 = vadd.f32 %v1545, %v1614
    %v1616 = vpop.f32.mrf.mxu0
    %v1617 = vadd.f32 %v1545, %v1616
    %1618 = vmatmul.bf16.gmra.mxu0 %v1514
    %v1619 = vpop.f32.mrf.mxu0
    %v1620 = vadd.f32 %v1545, %v1619
    %v1621 = vpop.f32.mrf.mxu0
    %v1622 = vadd.f32 %v1545, %v1621
    %1623 = vmatmul.bf16.gmra.mxu0 %v1515
    %v1624 = vpop.f32.mrf.mxu0
    %v1625 = vadd.f32 %v1545, %v1624
    %v1626 = vpop.f32.mrf.mxu0
    %v1627 = vadd.f32 %v1545, %v1626
    %1628 = vmatmul.bf16.gmra.mxu0 %v1516
    %v1629 = vpop.f32.mrf.mxu0
    %v1630 = vadd.f32 %v1545, %v1629
    %v1631 = vpop.f32.mrf.mxu0
    %v1632 = vadd.f32 %v1545, %v1631
    %1633 = vmatmul.bf16.gmra.mxu0 %v1517
    %v1634 = vpop.f32.mrf.mxu0
    %v1635 = vadd.f32 %v1545, %v1634
    %v1636 = vpop.f32.mrf.mxu0
    %v1637 = vadd.f32 %v1545, %v1636
    %1638 = vmatmul.bf16.gmra.mxu0 %v1518
    %v1639 = vpop.f32.mrf.mxu0
    %v1640 = vadd.f32 %v1545, %v1639
    %v1641 = vpop.f32.mrf.mxu0
    %v1642 = vadd.f32 %v1545, %v1641
    %1643 = vmatmul.bf16.gmra.mxu0 %v1519
    %v1644 = vpop.f32.mrf.mxu0
    %v1645 = vadd.f32 %v1545, %v1644
    %v1646 = vpop.f32.mrf.mxu0
    %v1647 = vadd.f32 %v1545, %v1646
    %1648 = vmatmul.bf16.gmra.mxu0 %v1520
    %v1649 = vpop.f32.mrf.mxu0
    %v1650 = vadd.f32 %v1545, %v1649
    %v1651 = vpop.f32.mrf.mxu0
    %v1652 = vadd.f32 %v1545, %v1651
    %1653 = vmatmul.bf16.gmra.mxu0 %v1521
    %v1654 = vpop.f32.mrf.mxu0
    %v1655 = vadd.f32 %v1545, %v1654
    %v1656 = vpop.f32.mrf.mxu0
    %v1657 = vadd.f32 %v1545, %v1656
    %1658 = vmatmul.bf16.gmra.mxu0 %v1522
    %v1659 = vpop.f32.mrf.mxu0
    %v1660 = vadd.f32 %v1545, %v1659
    %v1661 = vpop.f32.mrf.mxu0
    %v1662 = vadd.f32 %v1545, %v1661
    %1663 = vmatmul.bf16.gmra.mxu0 %v1523
    %v1664 = vpop.f32.mrf.mxu0
    %v1665 = vadd.f32 %v1545, %v1664
    %v1666 = vpop.f32.mrf.mxu0
    %v1667 = vadd.f32 %v1545, %v1666
    %1668 = vmatmul.bf16.gmra.mxu0 %v1524
    %v1669 = vpop.f32.mrf.mxu0
    %v1670 = vadd.f32 %v1545, %v1669
    %v1671 = vpop.f32.mrf.mxu0
    %v1672 = vadd.f32 %v1545, %v1671
    %1673 = vmatmul.bf16.gmra.mxu0 %v1525
    %v1674 = vpop.f32.mrf.mxu0
    %v1675 = vadd.f32 %v1545, %v1674
    %v1676 = vpop.f32.mrf.mxu0
    %v1677 = vadd.f32 %v1545, %v1676
    %1678 = vmatmul.bf16.gmra.mxu0 %v1526
    %v1679 = vpop.f32.mrf.mxu0
    %v1680 = vadd.f32 %v1545, %v1679
    %v1681 = vpop.f32.mrf.mxu0
    %v1682 = vadd.f32 %v1545, %v1681
    %1683 = vdwg.mxu0
    %1684 = vst [vmem:[#allocation7] sm:$0xff] %v1605
    %1685 = vst [vmem:[#allocation7 + $0x8] sm:$0xff] %v1607
    %1686 = vst [vmem:[#allocation7 + $0x10] sm:$0xff] %v1610
    %1687 = vst [vmem:[#allocation7 + $0x18] sm:$0xff] %v1612
    %1688 = vst [vmem:[#allocation7 + $0x20] sm:$0xff] %v1615
    %1689 = vst [vmem:[#allocation7 + $0x28] sm:$0xff] %v1617
    %1690 = vst [vmem:[#allocation7 + $0x30] sm:$0xff] %v1620
    %1691 = vst [vmem:[#allocation7 + $0x38] sm:$0xff] %v1622
    %1692 = vst [vmem:[#allocation7 + $0x40] sm:$0xff] %v1625
    %1693 = vst [vmem:[#allocation7 + $0x48] sm:$0xff] %v1627
    %1694 = vst [vmem:[#allocation7 + $0x50] sm:$0xff] %v1630
    %1695 = vst [vmem:[#allocation7 + $0x58] sm:$0xff] %v1632
    %1696 = vst [vmem:[#allocation7 + $0x60] sm:$0xff] %v1635
    %1697 = vst [vmem:[#allocation7 + $0x68] sm:$0xff] %v1637
    %1698 = vst [vmem:[#allocation7 + $0x70] sm:$0xff] %v1640
    %1699 = vst [vmem:[#allocation7 + $0x78] sm:$0xff] %v1642
    %1700 = vst [vmem:[#allocation7 + $0x80] sm:$0xff] %v1645
    %1701 = vst [vmem:[#allocation7 + $0x88] sm:$0xff] %v1647
    %1702 = vst [vmem:[#allocation7 + $0x90] sm:$0xff] %v1650
    %1703 = vst [vmem:[#allocation7 + $0x98] sm:$0xff] %v1652
    %1704 = vst [vmem:[#allocation7 + $0xa0] sm:$0xff] %v1655
    %1705 = vst [vmem:[#allocation7 + $0xa8] sm:$0xff] %v1657
    %1706 = vst [vmem:[#allocation7 + $0xb0] sm:$0xff] %v1660
    %1707 = vst [vmem:[#allocation7 + $0xb8] sm:$0xff] %v1662
    %1708 = vst [vmem:[#allocation7 + $0xc0] sm:$0xff] %v1665
    %1709 = vst [vmem:[#allocation7 + $0xc8] sm:$0xff] %v1667
    %1710 = vst [vmem:[#allocation7 + $0xd0] sm:$0xff] %v1670
    %1711 = vst [vmem:[#allocation7 + $0xd8] sm:$0xff] %v1672
    %1712 = vst [vmem:[#allocation7 + $0xe0] sm:$0xff] %v1675
    %1713 = vst [vmem:[#allocation7 + $0xe8] sm:$0xff] %v1677
    %1714 = vst [vmem:[#allocation7 + $0xf0] sm:$0xff] %v1680
    %1715 = vst [vmem:[#allocation7 + $0xf8] sm:$0xff] %v1682
    // Predicated region
    $region46: #{tpu_custom_call.1} parent=1 // pred_check
      _
    $region47: #{tpu_custom_call.1} parent=1 // pred_check_branch
      %1717 = sbr.rel (0) target = $region49
    $region48: #{tpu_custom_call.1} parent=1 // pred_region
      %1719 = vsyncadd [#allocation4], 0
      %s1720 = sshll.u32 [#allocation7], 4
      %s1721 = int_to_ptr.vmem [resolvable:$true] %s1720
      %s1722 = sshll.u32 %s9, 4
      %s1723 = int_to_ptr.hbm [resolvable:$true] %s1722
      %1728 = dma.vmem_to_hbm [thread:$0]  %s1721, 4096, %s1723, [#allocation4], 128, 128, 8
    $region49: #{tpu_custom_call.1} parent=1 // pred_fallthru
      _
    // Predicated region
    $region50: #{tpu_custom_call.1} parent=1 // pred_check
      _
    $region51: #{tpu_custom_call.1} parent=1 // pred_check_branch
      %1730 = sbr.rel (0) target = $region53
    $region52: #{tpu_custom_call.1} parent=1 // pred_region
      %1732 = dma.done [#allocation4], 4096
    $region53: #{tpu_custom_call.1} parent=1 // pred_fallthru
      _
    %1733 = vsyncpa [#allocation3], 1
    %1734 = vsyncpa [#allocation6], 1
    %1735 = vsyncpa [#allocation4], 1

</llo_original>
